<compile_context>
chip_gen: v5e
topology: v5e:2x2
jax: 0.10.0
libtpu: 0.0.40
codegen_flags: <defaults>
</compile_context>

<pallas_src>
import math

import jax
import jax.numpy as jnp
from jax import lax
from jax.experimental import pallas as pl
from jax.experimental.pallas import tpu as pltpu


def _mish(x):
    # mish(x) = x * tanh(softplus(x))
    #         = x * ((1 + e^x)^2 - 1) / ((1 + e^x)^2 + 1)
    # one exp + one divide (EUP-friendly); clamp before exp and select
    # mish(x) ~= x for large x to avoid overflow.
    xc = jnp.minimum(x, 20.0)
    e = jnp.exp(xc)
    n = (1.0 + e) * (1.0 + e)
    t = (n - 1.0) / (n + 1.0)
    return jnp.where(x > 20.0, x, x * t)


def _att_cls_kernel(x1_ref, x2_ref,
                    w1_ref, b1_ref, w2_ref, b2_ref,
                    w3_ref, b3_ref, w4_ref, b4_ref,
                    w5_ref, b5_ref,
                    o_ref,
                    f1_sc, f2_sc):
    f32 = jnp.float32
    j = pl.program_id(0)

    # ---- phase 1 (every step): one 128-wide q/k/v slice of ln1 / ln2 -------
    # bf16 x bf16 on the MXU, f32 accumulation; result parked in VMEM scratch.
    x1 = x1_ref[...].astype(w1_ref.dtype)
    x2 = x2_ref[...].astype(w2_ref.dtype)
    f1_sc[j] = (jnp.dot(x1, w1_ref[...], preferred_element_type=f32)
                + b1_ref[...])
    f2_sc[j] = (jnp.dot(x2, w2_ref[...], preferred_element_type=f32)
                + b2_ref[...])

    # ---- phase 2 (last step only): cross attention + MLP head --------------
    @pl.when(j == pl.num_programs(0) - 1)
    def _():
        f1_q, f1_k, f1_v = f1_sc[0], f1_sc[1], f1_sc[2]
        f2_q, f2_k, f2_v = f2_sc[0], f2_sc[1], f2_sc[2]

        d_head = f1_sc.shape[-1]                  # 128
        scale = 1.0 / math.sqrt(float(d_head))
        # contract the feature dim directly (no XLU transpose of K)
        dn = (((1,), (1,)), ((), ()))

        # attn1 = softmax((f2_q @ f1_k^T) / sqrt(128)); output1 = attn1 @ f1_v
        s1 = lax.dot_general(f2_q, f1_k, dn, preferred_element_type=f32) * scale
        s1 = s1 - jnp.max(s1, axis=-1, keepdims=True)
        p1 = jnp.exp(s1)
        a1 = p1 / jnp.sum(p1, axis=-1, keepdims=True)
        out1 = jnp.dot(a1, f1_v, preferred_element_type=f32)

        # attn2 = softmax((f1_q @ f2_k^T) / sqrt(128)); output2 = attn2 @ f2_v
        s2 = lax.dot_general(f1_q, f2_k, dn, preferred_element_type=f32) * scale
        s2 = s2 - jnp.max(s2, axis=-1, keepdims=True)
        p2 = jnp.exp(s2)
        a2 = p2 / jnp.sum(p2, axis=-1, keepdims=True)
        out2 = jnp.dot(a2, f2_v, preferred_element_type=f32)

        # ln3 on concat(out1, out2) without materializing the concat:
        # concat(o1, o2) @ W3 == o1 @ W3[:128] + o2 @ W3[128:]
        h = (jnp.dot(out1, w3_ref[:d_head, :], preferred_element_type=f32)
             + jnp.dot(out2, w3_ref[d_head:, :], preferred_element_type=f32)
             + b3_ref[...])
        h = _mish(h)

        # ln4 + mish
        h = jnp.dot(h, w4_ref[...], preferred_element_type=f32) + b4_ref[...]
        h = _mish(h)

        # ln5
        out = jnp.dot(h, w5_ref[...], preferred_element_type=f32) + b5_ref[...]
        o_ref[...] = out.astype(o_ref.dtype)


def att_cls_forward(x1, x2, params):
    """Fused ATT_CLS forward.  x1, x2: (B, 1024).  Returns (B, num_class)."""
    (w1, b1, w2, b2, w3, b3, w4, b4, w5, b5) = params
    B = x1.shape[0]
    d_in = w1.shape[0]
    d_head = w1.shape[1] // 3                     # 128
    n_slices = w1.shape[1] // d_head              # 3  (q, k, v)
    num_class = w5.shape[1]

    # Big projection weights in bf16 (halve HBM traffic, native bf16 MXU);
    # everything downstream stays f32 (tiny and accuracy-cheap).
    w1b = w1.astype(jnp.bfloat16)
    w2b = w2.astype(jnp.bfloat16)
    w3f, w4f, w5f = (w.astype(jnp.float32) for w in (w3, w4, w5))

    # biases as (1, N) lane-dense f32 rows
    b1r = b1.reshape(1, -1).astype(jnp.float32)
    b2r = b2.reshape(1, -1).astype(jnp.float32)
    b3r = b3.reshape(1, -1).astype(jnp.float32)
    b4r = b4.reshape(1, -1).astype(jnp.float32)
    b5r = b5.reshape(1, -1).astype(jnp.float32)

    def const(shape):
        nd = len(shape)
        return pl.BlockSpec(shape, lambda j, _nd=nd: (0,) * _nd)

    in_specs = [
        const(x1.shape),                                   # x1 (resident)
        const(x2.shape),                                   # x2 (resident)
        pl.BlockSpec((d_in, d_head), lambda j: (0, j)),    # w1 column slice j
        pl.BlockSpec((1, d_head), lambda j: (0, j)),       # b1 slice j
        pl.BlockSpec((d_in, d_head), lambda j: (0, j)),    # w2 column slice j
        pl.BlockSpec((1, d_head), lambda j: (0, j)),       # b2 slice j
        const(w3f.shape), const(b3r.shape),                # resident
        const(w4f.shape), const(b4r.shape),
        const(w5f.shape), const(b5r.shape),
    ]

    out = pl.pallas_call(
        _att_cls_kernel,
        out_shape=jax.ShapeDtypeStruct((B, num_class), x1.dtype),
        grid_spec=pltpu.PrefetchScalarGridSpec(
            num_scalar_prefetch=0,
            grid=(n_slices,),                              # q / k / v slices
            in_specs=in_specs,
            out_specs=pl.BlockSpec((B, num_class), lambda j: (0, 0)),
            scratch_shapes=[pltpu.VMEM((n_slices, B, d_head), jnp.float32),
                            pltpu.VMEM((n_slices, B, d_head), jnp.float32)],
        ),
        compiler_params=pltpu.CompilerParams(
            dimension_semantics=("arbitrary",),
        ),
    )(x1, x2, w1b, b1r, w2b, b2r, w3f, b3r, w4f, b4r, w5f, b5r)
    return out


# ----------------------------- pure-JAX reference -----------------------------

def _mish_ref(x):
    return x * jnp.tanh(jax.nn.softplus(x))


def _att_cls_ref(x1, x2, params):
    (w1, b1, w2, b2, w3, b3, w4, b4, w5, b5) = params
    f1 = jnp.dot(x1, w1, preferred_element_type=jnp.float32) + b1
    f2 = jnp.dot(x2, w2, preferred_element_type=jnp.float32) + b2
    f1_q, f1_k, f1_v = f1[:, :128], f1[:, 128:256], f1[:, 256:384]
    f2_q, f2_k, f2_v = f2[:, :128], f2[:, 128:256], f2[:, 256:384]
    attn1 = jax.nn.softmax(jnp.dot(f2_q, f1_k.T) / math.sqrt(128.0), axis=-1)
    attn2 = jax.nn.softmax(jnp.dot(f1_q, f2_k.T) / math.sqrt(128.0), axis=-1)
    out1 = jnp.dot(attn1, f1_v)
    out2 = jnp.dot(attn2, f2_v)
    out = jnp.concatenate([out1, out2], axis=-1)
    out = _mish_ref(jnp.dot(out, w3) + b3)
    out = _mish_ref(jnp.dot(out, w4) + b4)
    out = jnp.dot(out, w5) + b5
    return out


if __name__ == "__main__":
    key = jax.random.PRNGKey(0)
    B, D_IN, NUM_CLASS = 8, 1024, 10

    ks = jax.random.split(key, 12)

    def uinit(k, shape, fan_in):
        bound = 1.0 / math.sqrt(fan_in)
        return jax.random.uniform(k, shape, jnp.float32, -bound, bound)

    x1 = jax.random.normal(ks[0], (B, D_IN), dtype=jnp.float32)
    x2 = jax.random.normal(ks[1], (B, D_IN), dtype=jnp.float32)

    w1 = uinit(ks[2], (1024, 384), 1024)
    b1 = uinit(ks[3], (384,), 1024)
    w2 = uinit(ks[4], (1024, 384), 1024)
    b2 = uinit(ks[5], (384,), 1024)
    w3 = uinit(ks[6], (256, 256), 256)
    b3 = uinit(ks[7], (256,), 256)
    w4 = uinit(ks[8], (256, 256), 256)
    b4 = uinit(ks[9], (256,), 256)
    w5 = uinit(ks[10], (256, NUM_CLASS), 256)
    b5 = uinit(ks[11], (NUM_CLASS,), 256)

    params = (w1, b1, w2, b2, w3, b3, w4, b4, w5, b5)

    y = att_cls_forward(x1, x2, params)
    jax.block_until_ready(y)

    y_ref = _att_cls_ref(x1, x2, params)
    assert y.shape == (B, NUM_CLASS) and y.dtype == x1.dtype
    # bf16 projection weights (f32 accumulation) => validate at 2e-2 tolerance.
    assert jnp.allclose(y, y_ref, atol=2e-2, rtol=2e-2)

    print("KERNEL_OK")
</pallas_src>

<mosaic_0001>
module attributes {stable_mosaic.version = 11 : i64} {
  func.func @_att_cls_kernel(%arg0: i32, %arg1: memref<8x1024xf32, #tpu.memory_space<vmem>>, %arg2: memref<8x1024xf32, #tpu.memory_space<vmem>>, %arg3: memref<1024x128xbf16, #tpu.memory_space<vmem>>, %arg4: memref<1x128xf32, #tpu.memory_space<vmem>>, %arg5: memref<1024x128xbf16, #tpu.memory_space<vmem>>, %arg6: memref<1x128xf32, #tpu.memory_space<vmem>>, %arg7: memref<256x256xf32, #tpu.memory_space<vmem>>, %arg8: memref<1x256xf32, #tpu.memory_space<vmem>>, %arg9: memref<256x256xf32, #tpu.memory_space<vmem>>, %arg10: memref<1x256xf32, #tpu.memory_space<vmem>>, %arg11: memref<256x10xf32, #tpu.memory_space<vmem>>, %arg12: memref<1x10xf32, #tpu.memory_space<vmem>>, %arg13: memref<8x10xf32, #tpu.memory_space<vmem>>, %arg14: memref<3x8x128xf32, #tpu.memory_space<vmem>>, %arg15: memref<3x8x128xf32, #tpu.memory_space<vmem>>) attributes {dimension_semantics = [#tpu.dimension_semantics<arbitrary>], iteration_bounds = array<i64: 3>, scalar_prefetch = 0 : i64, scratch_operands = 2 : i64, tpu.core_type = #tpu.core_type<tc>, window_params = [{pipeline_mode = #tpu.pipeline_mode<synchronous>, transform_indices = @transform_0, window_bounds = array<i64: 8, 1024>}, {pipeline_mode = #tpu.pipeline_mode<synchronous>, transform_indices = @transform_1, window_bounds = array<i64: 8, 1024>}, {transform_indices = @transform_2, window_bounds = array<i64: 1024, 128>}, {transform_indices = @transform_3, window_bounds = array<i64: 1, 128>}, {transform_indices = @transform_4, window_bounds = array<i64: 1024, 128>}, {transform_indices = @transform_5, window_bounds = array<i64: 1, 128>}, {pipeline_mode = #tpu.pipeline_mode<synchronous>, transform_indices = @transform_6, window_bounds = array<i64: 256, 256>}, {pipeline_mode = #tpu.pipeline_mode<synchronous>, transform_indices = @transform_7, window_bounds = array<i64: 1, 256>}, {pipeline_mode = #tpu.pipeline_mode<synchronous>, transform_indices = @transform_8, window_bounds = array<i64: 256, 256>}, {pipeline_mode = #tpu.pipeline_mode<synchronous>, transform_indices = @transform_9, window_bounds = array<i64: 1, 256>}, {pipeline_mode = #tpu.pipeline_mode<synchronous>, transform_indices = @transform_10, window_bounds = array<i64: 256, 10>}, {pipeline_mode = #tpu.pipeline_mode<synchronous>, transform_indices = @transform_11, window_bounds = array<i64: 1, 10>}, {pipeline_mode = #tpu.pipeline_mode<synchronous>, transform_indices = @transform_12, window_bounds = array<i64: 8, 10>}]} {
    %c0 = arith.constant 0 : index
    %c0_0 = arith.constant 0 : index
    %0 = vector.load %arg1[%c0, %c0_0] : memref<8x1024xf32, #tpu.memory_space<vmem>>, vector<8x1024xf32>
    %1 = arith.truncf %0 : vector<8x1024xf32> to vector<8x1024xbf16>
    %c0_1 = arith.constant 0 : index
    %c0_2 = arith.constant 0 : index
    %2 = vector.load %arg2[%c0_1, %c0_2] : memref<8x1024xf32, #tpu.memory_space<vmem>>, vector<8x1024xf32>
    %3 = arith.truncf %2 : vector<8x1024xf32> to vector<8x1024xbf16>
    %c0_3 = arith.constant 0 : index
    %c0_4 = arith.constant 0 : index
    %4 = vector.load %arg3[%c0_3, %c0_4] : memref<1024x128xbf16, #tpu.memory_space<vmem>>, vector<1024x128xbf16>
    %cst = arith.constant dense<0.000000e+00> : vector<8x128xf32>
    %5 = tpu.matmul %1, %4, %cst {dimension_numbers = #tpu.dot_dimension_numbers<[1], [0], [0], [1], [0, 0, 1, 1], [], []>} : vector<8x1024xbf16>, vector<1024x128xbf16>, vector<8x128xf32> -> vector<8x128xf32>
    %c0_5 = arith.constant 0 : index
    %c0_6 = arith.constant 0 : index
    %6 = vector.load %arg4[%c0_5, %c0_6] : memref<1x128xf32, #tpu.memory_space<vmem>>, vector<1x128xf32>
    %7 = vector.broadcast %6 : vector<1x128xf32> to vector<8x128xf32>
    %8 = arith.addf %5, %7 : vector<8x128xf32>
    %9 = arith.index_cast %arg0 : i32 to index
    %c0_7 = arith.constant 0 : index
    %c0_8 = arith.constant 0 : index
    %10 = vector.load %arg14[%9, %c0_7, %c0_8] : memref<3x8x128xf32, #tpu.memory_space<vmem>>, vector<1x8x128xf32>
    %11 = vector.shape_cast %10 : vector<1x8x128xf32> to vector<8x128xf32>
    %12 = vector.shape_cast %8 : vector<8x128xf32> to vector<1x8x128xf32>
    tpu.vector_store %arg14[%9, %c0_7, %c0_8], %12 {strides = array<i32>} : memref<3x8x128xf32, #tpu.memory_space<vmem>>, vector<1x8x128xf32>,
    %c0_9 = arith.constant 0 : index
    %c0_10 = arith.constant 0 : index
    %13 = vector.load %arg5[%c0_9, %c0_10] : memref<1024x128xbf16, #tpu.memory_space<vmem>>, vector<1024x128xbf16>
    %cst_11 = arith.constant dense<0.000000e+00> : vector<8x128xf32>
    %14 = tpu.matmul %3, %13, %cst_11 {dimension_numbers = #tpu.dot_dimension_numbers<[1], [0], [0], [1], [0, 0, 1, 1], [], []>} : vector<8x1024xbf16>, vector<1024x128xbf16>, vector<8x128xf32> -> vector<8x128xf32>
    %c0_12 = arith.constant 0 : index
    %c0_13 = arith.constant 0 : index
    %15 = vector.load %arg6[%c0_12, %c0_13] : memref<1x128xf32, #tpu.memory_space<vmem>>, vector<1x128xf32>
    %16 = vector.broadcast %15 : vector<1x128xf32> to vector<8x128xf32>
    %17 = arith.addf %14, %16 : vector<8x128xf32>
    %18 = arith.index_cast %arg0 : i32 to index
    %c0_14 = arith.constant 0 : index
    %c0_15 = arith.constant 0 : index
    %19 = vector.load %arg15[%18, %c0_14, %c0_15] : memref<3x8x128xf32, #tpu.memory_space<vmem>>, vector<1x8x128xf32>
    %20 = vector.shape_cast %19 : vector<1x8x128xf32> to vector<8x128xf32>
    %21 = vector.shape_cast %17 : vector<8x128xf32> to vector<1x8x128xf32>
    tpu.vector_store %arg15[%18, %c0_14, %c0_15], %21 {strides = array<i32>} : memref<3x8x128xf32, #tpu.memory_space<vmem>>, vector<1x8x128xf32>,
    %c2_i32 = arith.constant 2 : i32
    %22 = arith.cmpi eq, %arg0, %c2_i32 : i32
    %23 = arith.extui %22 : i1 to i32
    %c0_i32 = arith.constant 0 : i32
    %24 = arith.cmpi ne, %23, %c0_i32 : i32
    scf.if %24 {
      %c0_16 = arith.constant 0 : index
      %c0_17 = arith.constant 0 : index
      %c0_18 = arith.constant 0 : index
      %25 = vector.load %arg14[%c0_16, %c0_17, %c0_18] : memref<3x8x128xf32, #tpu.memory_space<vmem>>, vector<1x8x128xf32>
      %26 = vector.shape_cast %25 : vector<1x8x128xf32> to vector<8x128xf32>
      %c1 = arith.constant 1 : index
      %c0_19 = arith.constant 0 : index
      %c0_20 = arith.constant 0 : index
      %27 = vector.load %arg14[%c1, %c0_19, %c0_20] : memref<3x8x128xf32, #tpu.memory_space<vmem>>, vector<1x8x128xf32>
      %28 = vector.shape_cast %27 : vector<1x8x128xf32> to vector<8x128xf32>
      %c2 = arith.constant 2 : index
      %c0_21 = arith.constant 0 : index
      %c0_22 = arith.constant 0 : index
      %29 = vector.load %arg14[%c2, %c0_21, %c0_22] : memref<3x8x128xf32, #tpu.memory_space<vmem>>, vector<1x8x128xf32>
      %30 = vector.shape_cast %29 : vector<1x8x128xf32> to vector<8x128xf32>
      %c0_23 = arith.constant 0 : index
      %c0_24 = arith.constant 0 : index
      %c0_25 = arith.constant 0 : index
      %31 = vector.load %arg15[%c0_23, %c0_24, %c0_25] : memref<3x8x128xf32, #tpu.memory_space<vmem>>, vector<1x8x128xf32>
      %32 = vector.shape_cast %31 : vector<1x8x128xf32> to vector<8x128xf32>
      %c1_26 = arith.constant 1 : index
      %c0_27 = arith.constant 0 : index
      %c0_28 = arith.constant 0 : index
      %33 = vector.load %arg15[%c1_26, %c0_27, %c0_28] : memref<3x8x128xf32, #tpu.memory_space<vmem>>, vector<1x8x128xf32>
      %34 = vector.shape_cast %33 : vector<1x8x128xf32> to vector<8x128xf32>
      %c2_29 = arith.constant 2 : index
      %c0_30 = arith.constant 0 : index
      %c0_31 = arith.constant 0 : index
      %35 = vector.load %arg15[%c2_29, %c0_30, %c0_31] : memref<3x8x128xf32, #tpu.memory_space<vmem>>, vector<1x8x128xf32>
      %36 = vector.shape_cast %35 : vector<1x8x128xf32> to vector<8x128xf32>
      %cst_32 = arith.constant dense<0.000000e+00> : vector<8x8xf32>
      %37 = tpu.matmul %32, %28, %cst_32 {dimension_numbers = #tpu.dot_dimension_numbers<[1], [1], [0], [0], [0, 0, 1, 0], [], []>} : vector<8x128xf32>, vector<8x128xf32>, vector<8x8xf32> -> vector<8x8xf32>
      %cst_33 = arith.constant 0.0883883461 : f32
      %38 = vector.broadcast %cst_33 : f32 to vector<8x8xf32>
      %39 = arith.mulf %37, %38 : vector<8x8xf32>
      %cst_34 = arith.constant dense<0xFF800000> : vector<8xf32>
      %40 = vector.multi_reduction <maximumf>, %39, %cst_34 [1] : vector<8x8xf32> to vector<8xf32>
      %41 = vector.shape_cast %40 : vector<8xf32> to vector<8x1xf32>
      %42 = vector.broadcast %41 : vector<8x1xf32> to vector<8x8xf32>
      %43 = arith.subf %39, %42 : vector<8x8xf32>
      %44 = math.exp %43 : vector<8x8xf32>
      %cst_35 = arith.constant dense<0.000000e+00> : vector<8xf32>
      %45 = vector.multi_reduction <add>, %44, %cst_35 [1] : vector<8x8xf32> to vector<8xf32>
      %46 = vector.shape_cast %45 : vector<8xf32> to vector<8x1xf32>
      %47 = vector.broadcast %46 : vector<8x1xf32> to vector<8x8xf32>
      %48 = arith.divf %44, %47 : vector<8x8xf32>
      %cst_36 = arith.constant dense<0.000000e+00> : vector<8x128xf32>
      %49 = tpu.matmul %48, %30, %cst_36 {dimension_numbers = #tpu.dot_dimension_numbers<[1], [0], [0], [1], [0, 0, 1, 1], [], []>} : vector<8x8xf32>, vector<8x128xf32>, vector<8x128xf32> -> vector<8x128xf32>
      %cst_37 = arith.constant dense<0.000000e+00> : vector<8x8xf32>
      %50 = tpu.matmul %26, %34, %cst_37 {dimension_numbers = #tpu.dot_dimension_numbers<[1], [1], [0], [0], [0, 0, 1, 0], [], []>} : vector<8x128xf32>, vector<8x128xf32>, vector<8x8xf32> -> vector<8x8xf32>
      %cst_38 = arith.constant 0.0883883461 : f32
      %51 = vector.broadcast %cst_38 : f32 to vector<8x8xf32>
      %52 = arith.mulf %50, %51 : vector<8x8xf32>
      %cst_39 = arith.constant dense<0xFF800000> : vector<8xf32>
      %53 = vector.multi_reduction <maximumf>, %52, %cst_39 [1] : vector<8x8xf32> to vector<8xf32>
      %54 = vector.shape_cast %53 : vector<8xf32> to vector<8x1xf32>
      %55 = vector.broadcast %54 : vector<8x1xf32> to vector<8x8xf32>
      %56 = arith.subf %52, %55 : vector<8x8xf32>
      %57 = math.exp %56 : vector<8x8xf32>
      %cst_40 = arith.constant dense<0.000000e+00> : vector<8xf32>
      %58 = vector.multi_reduction <add>, %57, %cst_40 [1] : vector<8x8xf32> to vector<8xf32>
      %59 = vector.shape_cast %58 : vector<8xf32> to vector<8x1xf32>
      %60 = vector.broadcast %59 : vector<8x1xf32> to vector<8x8xf32>
      %61 = arith.divf %57, %60 : vector<8x8xf32>
      %cst_41 = arith.constant dense<0.000000e+00> : vector<8x128xf32>
      %62 = tpu.matmul %61, %36, %cst_41 {dimension_numbers = #tpu.dot_dimension_numbers<[1], [0], [0], [1], [0, 0, 1, 1], [], []>} : vector<8x8xf32>, vector<8x128xf32>, vector<8x128xf32> -> vector<8x128xf32>
      %c0_42 = arith.constant 0 : index
      %c0_43 = arith.constant 0 : index
      %63 = vector.load %arg7[%c0_42, %c0_43] : memref<256x256xf32, #tpu.memory_space<vmem>>, vector<128x256xf32>
      %cst_44 = arith.constant dense<0.000000e+00> : vector<8x256xf32>
      %64 = tpu.matmul %49, %63, %cst_44 {dimension_numbers = #tpu.dot_dimension_numbers<[1], [0], [0], [1], [0, 0, 1, 1], [], []>} : vector<8x128xf32>, vector<128x256xf32>, vector<8x256xf32> -> vector<8x256xf32>
      %c128 = arith.constant 128 : index
      %c0_45 = arith.constant 0 : index
      %65 = vector.load %arg7[%c128, %c0_45] : memref<256x256xf32, #tpu.memory_space<vmem>>, vector<128x256xf32>
      %cst_46 = arith.constant dense<0.000000e+00> : vector<8x256xf32>
      %66 = tpu.matmul %62, %65, %cst_46 {dimension_numbers = #tpu.dot_dimension_numbers<[1], [0], [0], [1], [0, 0, 1, 1], [], []>} : vector<8x128xf32>, vector<128x256xf32>, vector<8x256xf32> -> vector<8x256xf32>
      %67 = arith.addf %64, %66 : vector<8x256xf32>
      %c0_47 = arith.constant 0 : index
      %c0_48 = arith.constant 0 : index
      %68 = vector.load %arg8[%c0_47, %c0_48] : memref<1x256xf32, #tpu.memory_space<vmem>>, vector<1x256xf32>
      %69 = vector.broadcast %68 : vector<1x256xf32> to vector<8x256xf32>
      %70 = arith.addf %67, %69 : vector<8x256xf32>
      %cst_49 = arith.constant 2.000000e+01 : f32
      %71 = vector.broadcast %cst_49 : f32 to vector<8x256xf32>
      %72 = arith.minimumf %70, %71 : vector<8x256xf32>
      %73 = math.exp %72 : vector<8x256xf32>
      %cst_50 = arith.constant 1.000000e+00 : f32
      %74 = vector.broadcast %cst_50 : f32 to vector<8x256xf32>
      %75 = arith.addf %74, %73 : vector<8x256xf32>
      %cst_51 = arith.constant 1.000000e+00 : f32
      %76 = vector.broadcast %cst_51 : f32 to vector<8x256xf32>
      %77 = arith.addf %76, %73 : vector<8x256xf32>
      %78 = arith.mulf %75, %77 : vector<8x256xf32>
      %cst_52 = arith.constant 1.000000e+00 : f32
      %79 = vector.broadcast %cst_52 : f32 to vector<8x256xf32>
      %80 = arith.subf %78, %79 : vector<8x256xf32>
      %cst_53 = arith.constant 1.000000e+00 : f32
      %81 = vector.broadcast %cst_53 : f32 to vector<8x256xf32>
      %82 = arith.addf %78, %81 : vector<8x256xf32>
      %83 = arith.divf %80, %82 : vector<8x256xf32>
      %cst_54 = arith.constant 2.000000e+01 : f32
      %84 = vector.broadcast %cst_54 : f32 to vector<8x256xf32>
      %85 = arith.cmpf ogt, %70, %84 : vector<8x256xf32>
      %86 = arith.mulf %70, %83 : vector<8x256xf32>
      %87 = arith.select %85, %70, %86 : vector<8x256xi1>, vector<8x256xf32>
      %c0_55 = arith.constant 0 : index
      %c0_56 = arith.constant 0 : index
      %88 = vector.load %arg9[%c0_55, %c0_56] : memref<256x256xf32, #tpu.memory_space<vmem>>, vector<256x256xf32>
      %cst_57 = arith.constant dense<0.000000e+00> : vector<8x256xf32>
      %89 = tpu.matmul %87, %88, %cst_57 {dimension_numbers = #tpu.dot_dimension_numbers<[1], [0], [0], [1], [0, 0, 1, 1], [], []>} : vector<8x256xf32>, vector<256x256xf32>, vector<8x256xf32> -> vector<8x256xf32>
      %c0_58 = arith.constant 0 : index
      %c0_59 = arith.constant 0 : index
      %90 = vector.load %arg10[%c0_58, %c0_59] : memref<1x256xf32, #tpu.memory_space<vmem>>, vector<1x256xf32>
      %91 = vector.broadcast %90 : vector<1x256xf32> to vector<8x256xf32>
      %92 = arith.addf %89, %91 : vector<8x256xf32>
      %cst_60 = arith.constant 2.000000e+01 : f32
      %93 = vector.broadcast %cst_60 : f32 to vector<8x256xf32>
      %94 = arith.minimumf %92, %93 : vector<8x256xf32>
      %95 = math.exp %94 : vector<8x256xf32>
      %cst_61 = arith.constant 1.000000e+00 : f32
      %96 = vector.broadcast %cst_61 : f32 to vector<8x256xf32>
      %97 = arith.addf %96, %95 : vector<8x256xf32>
      %cst_62 = arith.constant 1.000000e+00 : f32
      %98 = vector.broadcast %cst_62 : f32 to vector<8x256xf32>
      %99 = arith.addf %98, %95 : vector<8x256xf32>
      %100 = arith.mulf %97, %99 : vector<8x256xf32>
      %cst_63 = arith.constant 1.000000e+00 : f32
      %101 = vector.broadcast %cst_63 : f32 to vector<8x256xf32>
      %102 = arith.subf %100, %101 : vector<8x256xf32>
      %cst_64 = arith.constant 1.000000e+00 : f32
      %103 = vector.broadcast %cst_64 : f32 to vector<8x256xf32>
      %104 = arith.addf %100, %103 : vector<8x256xf32>
      %105 = arith.divf %102, %104 : vector<8x256xf32>
      %cst_65 = arith.constant 2.000000e+01 : f32
      %106 = vector.broadcast %cst_65 : f32 to vector<8x256xf32>
      %107 = arith.cmpf ogt, %92, %106 : vector<8x256xf32>
      %108 = arith.mulf %92, %105 : vector<8x256xf32>
      %109 = arith.select %107, %92, %108 : vector<8x256xi1>, vector<8x256xf32>
      %c0_66 = arith.constant 0 : index
      %c0_67 = arith.constant 0 : index
      %110 = vector.load %arg11[%c0_66, %c0_67] : memref<256x10xf32, #tpu.memory_space<vmem>>, vector<256x10xf32>
      %cst_68 = arith.constant dense<0.000000e+00> : vector<8x10xf32>
      %111 = tpu.matmul %109, %110, %cst_68 {dimension_numbers = #tpu.dot_dimension_numbers<[1], [0], [0], [1], [0, 0, 1, 1], [], []>} : vector<8x256xf32>, vector<256x10xf32>, vector<8x10xf32> -> vector<8x10xf32>
      %c0_69 = arith.constant 0 : index
      %c0_70 = arith.constant 0 : index
      %112 = vector.load %arg12[%c0_69, %c0_70] : memref<1x10xf32, #tpu.memory_space<vmem>>, vector<1x10xf32>
      %113 = vector.broadcast %112 : vector<1x10xf32> to vector<8x10xf32>
      %114 = arith.addf %111, %113 : vector<8x10xf32>
      %c0_71 = arith.constant 0 : index
      %c0_72 = arith.constant 0 : index
      %115 = vector.load %arg13[%c0_71, %c0_72] : memref<8x10xf32, #tpu.memory_space<vmem>>, vector<8x10xf32>
      tpu.vector_store %arg13[%c0_71, %c0_72], %114 {strides = array<i32>} : memref<8x10xf32, #tpu.memory_space<vmem>>, vector<8x10xf32>,
    } else {
    }
    return
  }
  func.func @transform_0(%arg0: i32) -> (i32, i32) {
    %c0_i32 = arith.constant 0 : i32
    %c0_i32_0 = arith.constant 0 : i32
    %c0_i32_1 = arith.constant 0 : i32
    return %c0_i32, %c0_i32_0 : i32, i32
  }
  func.func @transform_1(%arg0: i32) -> (i32, i32) {
    %c0_i32 = arith.constant 0 : i32
    %c0_i32_0 = arith.constant 0 : i32
    %c0_i32_1 = arith.constant 0 : i32
    return %c0_i32, %c0_i32_0 : i32, i32
  }
  func.func @transform_2(%arg0: i32) -> (i32, i32) {
    %c0_i32 = arith.constant 0 : i32
    %c0_i32_0 = arith.constant 0 : i32
    return %c0_i32, %arg0 : i32, i32
  }
  func.func @transform_3(%arg0: i32) -> (i32, i32) {
    %c0_i32 = arith.constant 0 : i32
    %c0_i32_0 = arith.constant 0 : i32
    return %c0_i32, %arg0 : i32, i32
  }
  func.func @transform_4(%arg0: i32) -> (i32, i32) {
    %c0_i32 = arith.constant 0 : i32
    %c0_i32_0 = arith.constant 0 : i32
    return %c0_i32, %arg0 : i32, i32
  }
  func.func @transform_5(%arg0: i32) -> (i32, i32) {
    %c0_i32 = arith.constant 0 : i32
    %c0_i32_0 = arith.constant 0 : i32
    return %c0_i32, %arg0 : i32, i32
  }
  func.func @transform_6(%arg0: i32) -> (i32, i32) {
    %c0_i32 = arith.constant 0 : i32
    %c0_i32_0 = arith.constant 0 : i32
    %c0_i32_1 = arith.constant 0 : i32
    return %c0_i32, %c0_i32_0 : i32, i32
  }
  func.func @transform_7(%arg0: i32) -> (i32, i32) {
    %c0_i32 = arith.constant 0 : i32
    %c0_i32_0 = arith.constant 0 : i32
    %c0_i32_1 = arith.constant 0 : i32
    return %c0_i32, %c0_i32_0 : i32, i32
  }
  func.func @transform_8(%arg0: i32) -> (i32, i32) {
    %c0_i32 = arith.constant 0 : i32
    %c0_i32_0 = arith.constant 0 : i32
    %c0_i32_1 = arith.constant 0 : i32
    return %c0_i32, %c0_i32_0 : i32, i32
  }
  func.func @transform_9(%arg0: i32) -> (i32, i32) {
    %c0_i32 = arith.constant 0 : i32
    %c0_i32_0 = arith.constant 0 : i32
    %c0_i32_1 = arith.constant 0 : i32
    return %c0_i32, %c0_i32_0 : i32, i32
  }
  func.func @transform_10(%arg0: i32) -> (i32, i32) {
    %c0_i32 = arith.constant 0 : i32
    %c0_i32_0 = arith.constant 0 : i32
    %c0_i32_1 = arith.constant 0 : i32
    return %c0_i32, %c0_i32_0 : i32, i32
  }
  func.func @transform_11(%arg0: i32) -> (i32, i32) {
    %c0_i32 = arith.constant 0 : i32
    %c0_i32_0 = arith.constant 0 : i32
    %c0_i32_1 = arith.constant 0 : i32
    return %c0_i32, %c0_i32_0 : i32, i32
  }
  func.func @transform_12(%arg0: i32) -> (i32, i32) {
    %c0_i32 = arith.constant 0 : i32
    %c0_i32_0 = arith.constant 0 : i32
    %c0_i32_1 = arith.constant 0 : i32
    return %c0_i32, %c0_i32_0 : i32, i32
  }
}

</mosaic_0001>

<llo_original>
// kernel: tpu_custom_call.1
$region0: #{tpu_custom_call.1}
  #allocation0 [shape = 'u32[]', space=smem, size = 0x4, offset = 0x4, fixed_abs, tag = 'smem constant byte address 0x4 - core index']
  #allocation1 [shape = 'u32[72,128]{1,0:T(1,128)}', space=vmem, size = 0x9000, scoped, tag = 'internal scratch']
  #allocation2 [shape = 'f32[3,8,128]{2,1,0:T(8,128)}', space=vmem, size = 0x3000, scoped, tag = 'scratch operand']
  #allocation3 [shape = 'f32[3,8,128]{2,1,0:T(8,128)}', space=vmem, size = 0x3000, scoped, tag = 'scratch operand']
  %s0 = inlined_call_operand.vmem [shape: f32[8,1024], index: 0, kind: input, shape index: {}]
  %s1 = inlined_call_operand.vmem [shape: f32[8,1024], index: 1, kind: input, shape index: {}]
  %s2 = inlined_call_operand.hbm [shape: bf16[1024,384], index: 2, kind: input, shape index: {}]
  %s3 = inlined_call_operand.vmem [shape: f32[1,384], index: 3, kind: input, shape index: {}]
  %s4 = inlined_call_operand.hbm [shape: bf16[1024,384], index: 4, kind: input, shape index: {}]
  %s5 = inlined_call_operand.vmem [shape: f32[1,384], index: 5, kind: input, shape index: {}]
  %s6 = inlined_call_operand.hbm [shape: f32[256,256], index: 6, kind: input, shape index: {}]
  %s7 = inlined_call_operand.vmem [shape: f32[1,256], index: 7, kind: input, shape index: {}]
  %s8 = inlined_call_operand.hbm [shape: f32[256,256], index: 8, kind: input, shape index: {}]
  %s9 = inlined_call_operand.vmem [shape: f32[1,256], index: 9, kind: input, shape index: {}]
  %s10 = inlined_call_operand.vmem [shape: f32[256,10], index: 10, kind: input, shape index: {}]
  %s11 = inlined_call_operand.vmem [shape: f32[1,10], index: 11, kind: input, shape index: {}]
  %s12 = inlined_call_operand.hbm [shape: f32[8,10], index: 12, kind: output, shape index: {}]
  %s13 = sld [smem:[#allocation0]]
  $region101: #{tpu_custom_call.1} parent=0
    _
  %s15 = ssub.s32 1, %s13
  %s16 = scalar_select 0, %s15, %s13
  $region1: #{tpu_custom_call.1} parent=0
    #allocation4 [shape = 'u8[524288]{0}', space=vmem, size = 0x80000, scoped, tag = 'input window, operand 2']
    #allocation5 [shape = 's32[2]{0}', space=sflag, size = 0x8, scoped, tag = 'scoped memory for tpu_custom_call.1']
    #allocation6 [shape = 's32[2]{0}', space=sflag, size = 0x8, scoped, tag = 'scoped memory for tpu_custom_call.1']
    #allocation7 [shape = 'u8[524288]{0}', space=vmem, size = 0x80000, scoped, tag = 'input window, operand 4']
    #allocation8 [shape = 's32[2]{0}', space=sflag, size = 0x8, scoped, tag = 'scoped memory for tpu_custom_call.1']
    #allocation9 [shape = 'u8[262144]{0}', space=vmem, size = 0x40000, scoped, tag = 'input window, operand 6, single buffered']
    #allocation10 [shape = 'u8[262144]{0}', space=vmem, size = 0x40000, scoped, tag = 'input window, operand 8, single buffered']
    #allocation11 [shape = 's32[1]{0}', space=sflag, size = 0x4, scoped, tag = 'scoped memory for tpu_custom_call.1']
    #allocation12 [shape = 'u8[4096]{0}', space=vmem, size = 0x1000, scoped, tag = 'output window, operand 0, single buffered']
    %17 = vsyncpa [#allocation5], 0
    %s18 = scalar_lea.sflag [#allocation5], 1
    %19 = vsyncpa %s18, 0
    %20 = vsyncpa [#allocation8], 0
    %s21 = scalar_lea.sflag [#allocation8], 1
    %22 = vsyncpa %s21, 0
    %23 = vsyncpa [#allocation11], 0
    %24 = vsyncpa [#allocation6], 0
    loop: start=0, step=1, limit=5
    $region2: #{tpu_custom_call.1} parent=1 // loop_pre_header
      _
    $region3: #{tpu_custom_call.1} parent=1 // loop_header
      %s26 = sphi 0, %s30
      %p27 = scmp.ge.s32.totalorder %s26, 5
      %s34 = sphi 0, %s34
      %s36 = sphi 0, %s34
      %s37 = sphi 0, %s36
      %s51 = sphi 0, %s37
      %s55 = sphi 0, %s55
      %s57 = sphi 0, %s55
      %s58 = sphi 0, %s57
      %s72 = sphi 0, %s58
      %s78 = sphi 0, %s80
      %s81 = sphi 0, %s78
      %s82 = sphi 0, %s81
      %s98 = sphi 0, %s82
      %s104 = sphi 0, %s106
      %s107 = sphi 0, %s104
      %s108 = sphi 0, %s107
      %s124 = sphi 0, %s108
      %s130 = sphi 0, %s132
      %s133 = sphi 0, %s130
      %s134 = sphi 0, %s133
      %s150 = sphi 0, %s134
      %s156 = sphi 0, %s158
      %s159 = sphi 0, %s156
      %s160 = sphi 0, %s159
      %s176 = sphi 0, %s160
      %s180 = sphi 0, %s180
      %s182 = sphi 0, %s180
      %s183 = sphi 0, %s182
      %s197 = sphi 0, %s183
      %s201 = sphi 0, %s201
      %s203 = sphi 0, %s201
      %s204 = sphi 0, %s203
      %s218 = sphi 0, %s204
      %s222 = sphi 0, %s222
      %s224 = sphi 0, %s222
      %s225 = sphi 0, %s224
      %s239 = sphi 0, %s225
      %s243 = sphi 0, %s243
      %s245 = sphi 0, %s243
      %s246 = sphi 0, %s245
      %s260 = sphi 0, %s246
      %s264 = sphi 0, %s264
      %s266 = sphi 0, %s264
      %s267 = sphi 0, %s266
      %s281 = sphi 0, %s267
      %s285 = sphi 0, %s285
      %s287 = sphi 0, %s285
      %s288 = sphi 0, %s287
      %s302 = sphi 0, %s288
      %s306 = sphi 0, %s306
      %s308 = sphi 0, %s306
      %s309 = sphi 0, %s308
      %s323 = sphi 0, %s309
    $region4: #{tpu_custom_call.1} parent=1 // loop_header_branch
      %29 = sbr.rel (%p27) target = $region8
    $region5: #{tpu_custom_call.1} parent=1 // loop_body
      %s31 = ssub.s32 %s26, 1
      %s32 = ssub.s32 %s26, 2
      %s33 = sadd.s32 %s26, 1
      %s35 = sadd.s32 %s34, 1
      %p38 = scmp.eq.s32.totalorder %s26, 2
      %p39 = scmp.ne.s32.totalorder %s34, %s36
      %p40 = scmp.eq.s32.totalorder %s26, 0
      %p41 = por %p39, %p40
      %p42 = scmp.ne.s32.totalorder %s34, %s36
      %p43 = scmp.eq.s32.totalorder %s31, 2
      %p44 = por %p42, %p43
      %p45 = scmp.ne.s32.totalorder %s36, %s37
      %p46 = scmp.eq.s32.totalorder %s31, 0
      %p47 = por %p45, %p46
      %p48 = scmp.ne.s32.totalorder %s36, %s37
      %p49 = scmp.eq.s32.totalorder %s32, 2
      %p50 = por %p48, %p49
      %p52 = scmp.ne.s32.totalorder %s37, %s51
      %p53 = scmp.eq.s32.totalorder %s32, 0
      %p54 = por %p52, %p53
      %s56 = sadd.s32 %s55, 1
      %p59 = scmp.eq.s32.totalorder %s26, 2
      %p60 = scmp.ne.s32.totalorder %s55, %s57
      %p61 = scmp.eq.s32.totalorder %s26, 0
      %p62 = por %p60, %p61
      %p63 = scmp.ne.s32.totalorder %s55, %s57
      %p64 = scmp.eq.s32.totalorder %s31, 2
      %p65 = por %p63, %p64
      %p66 = scmp.ne.s32.totalorder %s57, %s58
      %p67 = scmp.eq.s32.totalorder %s31, 0
      %p68 = por %p66, %p67
      %p69 = scmp.ne.s32.totalorder %s57, %s58
      %p70 = scmp.eq.s32.totalorder %s32, 2
      %p71 = por %p69, %p70
      %p73 = scmp.ne.s32.totalorder %s58, %s72
      %p74 = scmp.eq.s32.totalorder %s32, 0
      %p75 = por %p73, %p74
      %s76 = ssub.s32 %s26, %s33
      %p77 = scmp.eq.s32.totalorder %s76, 0
      %s79 = sadd.s32 %s78, 1
      %s80 = scalar_select %p77, %s78, %s79
      %p83 = pneg %p77
      %p84 = scmp.eq.s32.totalorder %s26, 2
      %p85 = por %p83, %p84
      %p86 = scmp.ne.s32.totalorder %s78, %s81
      %p87 = scmp.eq.s32.totalorder %s26, 0
      %p88 = por %p86, %p87
      %p89 = scmp.ne.s32.totalorder %s78, %s81
      %p90 = scmp.eq.s32.totalorder %s31, 2
      %p91 = por %p89, %p90
      %p92 = scmp.ne.s32.totalorder %s81, %s82
      %p93 = scmp.eq.s32.totalorder %s31, 0
      %p94 = por %p92, %p93
      %p95 = scmp.ne.s32.totalorder %s81, %s82
      %p96 = scmp.eq.s32.totalorder %s32, 2
      %p97 = por %p95, %p96
      %p99 = scmp.ne.s32.totalorder %s82, %s98
      %p100 = scmp.eq.s32.totalorder %s32, 0
      %p101 = por %p99, %p100
      %s102 = ssub.s32 %s26, %s33
      %p103 = scmp.eq.s32.totalorder %s102, 0
      %s105 = sadd.s32 %s104, 1
      %s106 = scalar_select %p103, %s104, %s105
      %p109 = pneg %p103
      %p110 = scmp.eq.s32.totalorder %s26, 2
      %p111 = por %p109, %p110
      %p112 = scmp.ne.s32.totalorder %s104, %s107
      %p113 = scmp.eq.s32.totalorder %s26, 0
      %p114 = por %p112, %p113
      %p115 = scmp.ne.s32.totalorder %s104, %s107
      %p116 = scmp.eq.s32.totalorder %s31, 2
      %p117 = por %p115, %p116
      %p118 = scmp.ne.s32.totalorder %s107, %s108
      %p119 = scmp.eq.s32.totalorder %s31, 0
      %p120 = por %p118, %p119
      %p121 = scmp.ne.s32.totalorder %s107, %s108
      %p122 = scmp.eq.s32.totalorder %s32, 2
      %p123 = por %p121, %p122
      %p125 = scmp.ne.s32.totalorder %s108, %s124
      %p126 = scmp.eq.s32.totalorder %s32, 0
      %p127 = por %p125, %p126
      %s128 = ssub.s32 %s26, %s33
      %p129 = scmp.eq.s32.totalorder %s128, 0
      %s131 = sadd.s32 %s130, 1
      %s132 = scalar_select %p129, %s130, %s131
      %p135 = pneg %p129
      %p136 = scmp.eq.s32.totalorder %s26, 2
      %p137 = por %p135, %p136
      %p138 = scmp.ne.s32.totalorder %s130, %s133
      %p139 = scmp.eq.s32.totalorder %s26, 0
      %p140 = por %p138, %p139
      %p141 = scmp.ne.s32.totalorder %s130, %s133
      %p142 = scmp.eq.s32.totalorder %s31, 2
      %p143 = por %p141, %p142
      %p144 = scmp.ne.s32.totalorder %s133, %s134
      %p145 = scmp.eq.s32.totalorder %s31, 0
      %p146 = por %p144, %p145
      %p147 = scmp.ne.s32.totalorder %s133, %s134
      %p148 = scmp.eq.s32.totalorder %s32, 2
      %p149 = por %p147, %p148
      %p151 = scmp.ne.s32.totalorder %s134, %s150
      %p152 = scmp.eq.s32.totalorder %s32, 0
      %p153 = por %p151, %p152
      %s154 = ssub.s32 %s26, %s33
      %p155 = scmp.eq.s32.totalorder %s154, 0
      %s157 = sadd.s32 %s156, 1
      %s158 = scalar_select %p155, %s156, %s157
      %p161 = pneg %p155
      %p162 = scmp.eq.s32.totalorder %s26, 2
      %p163 = por %p161, %p162
      %p164 = scmp.ne.s32.totalorder %s156, %s159
      %p165 = scmp.eq.s32.totalorder %s26, 0
      %p166 = por %p164, %p165
      %p167 = scmp.ne.s32.totalorder %s156, %s159
      %p168 = scmp.eq.s32.totalorder %s31, 2
      %p169 = por %p167, %p168
      %p170 = scmp.ne.s32.totalorder %s159, %s160
      %p171 = scmp.eq.s32.totalorder %s31, 0
      %p172 = por %p170, %p171
      %p173 = scmp.ne.s32.totalorder %s159, %s160
      %p174 = scmp.eq.s32.totalorder %s32, 2
      %p175 = por %p173, %p174
      %p177 = scmp.ne.s32.totalorder %s160, %s176
      %p178 = scmp.eq.s32.totalorder %s32, 0
      %p179 = por %p177, %p178
      %s181 = sadd.s32 %s180, 1
      %p184 = scmp.eq.s32.totalorder %s26, 2
      %p185 = scmp.ne.s32.totalorder %s180, %s182
      %p186 = scmp.eq.s32.totalorder %s26, 0
      %p187 = por %p185, %p186
      %p188 = scmp.ne.s32.totalorder %s180, %s182
      %p189 = scmp.eq.s32.totalorder %s31, 2
      %p190 = por %p188, %p189
      %p191 = scmp.ne.s32.totalorder %s182, %s183
      %p192 = scmp.eq.s32.totalorder %s31, 0
      %p193 = por %p191, %p192
      %p194 = scmp.ne.s32.totalorder %s182, %s183
      %p195 = scmp.eq.s32.totalorder %s32, 2
      %p196 = por %p194, %p195
      %p198 = scmp.ne.s32.totalorder %s183, %s197
      %p199 = scmp.eq.s32.totalorder %s32, 0
      %p200 = por %p198, %p199
      %s202 = sadd.s32 %s201, 1
      %p205 = scmp.eq.s32.totalorder %s26, 2
      %p206 = scmp.ne.s32.totalorder %s201, %s203
      %p207 = scmp.eq.s32.totalorder %s26, 0
      %p208 = por %p206, %p207
      %p209 = scmp.ne.s32.totalorder %s201, %s203
      %p210 = scmp.eq.s32.totalorder %s31, 2
      %p211 = por %p209, %p210
      %p212 = scmp.ne.s32.totalorder %s203, %s204
      %p213 = scmp.eq.s32.totalorder %s31, 0
      %p214 = por %p212, %p213
      %p215 = scmp.ne.s32.totalorder %s203, %s204
      %p216 = scmp.eq.s32.totalorder %s32, 2
      %p217 = por %p215, %p216
      %p219 = scmp.ne.s32.totalorder %s204, %s218
      %p220 = scmp.eq.s32.totalorder %s32, 0
      %p221 = por %p219, %p220
      %s223 = sadd.s32 %s222, 1
      %p226 = scmp.eq.s32.totalorder %s26, 2
      %p227 = scmp.ne.s32.totalorder %s222, %s224
      %p228 = scmp.eq.s32.totalorder %s26, 0
      %p229 = por %p227, %p228
      %p230 = scmp.ne.s32.totalorder %s222, %s224
      %p231 = scmp.eq.s32.totalorder %s31, 2
      %p232 = por %p230, %p231
      %p233 = scmp.ne.s32.totalorder %s224, %s225
      %p234 = scmp.eq.s32.totalorder %s31, 0
      %p235 = por %p233, %p234
      %p236 = scmp.ne.s32.totalorder %s224, %s225
      %p237 = scmp.eq.s32.totalorder %s32, 2
      %p238 = por %p236, %p237
      %p240 = scmp.ne.s32.totalorder %s225, %s239
      %p241 = scmp.eq.s32.totalorder %s32, 0
      %p242 = por %p240, %p241
      %s244 = sadd.s32 %s243, 1
      %p247 = scmp.eq.s32.totalorder %s26, 2
      %p248 = scmp.ne.s32.totalorder %s243, %s245
      %p249 = scmp.eq.s32.totalorder %s26, 0
      %p250 = por %p248, %p249
      %p251 = scmp.ne.s32.totalorder %s243, %s245
      %p252 = scmp.eq.s32.totalorder %s31, 2
      %p253 = por %p251, %p252
      %p254 = scmp.ne.s32.totalorder %s245, %s246
      %p255 = scmp.eq.s32.totalorder %s31, 0
      %p256 = por %p254, %p255
      %p257 = scmp.ne.s32.totalorder %s245, %s246
      %p258 = scmp.eq.s32.totalorder %s32, 2
      %p259 = por %p257, %p258
      %p261 = scmp.ne.s32.totalorder %s246, %s260
      %p262 = scmp.eq.s32.totalorder %s32, 0
      %p263 = por %p261, %p262
      %s265 = sadd.s32 %s264, 1
      %p268 = scmp.eq.s32.totalorder %s26, 2
      %p269 = scmp.ne.s32.totalorder %s264, %s266
      %p270 = scmp.eq.s32.totalorder %s26, 0
      %p271 = por %p269, %p270
      %p272 = scmp.ne.s32.totalorder %s264, %s266
      %p273 = scmp.eq.s32.totalorder %s31, 2
      %p274 = por %p272, %p273
      %p275 = scmp.ne.s32.totalorder %s266, %s267
      %p276 = scmp.eq.s32.totalorder %s31, 0
      %p277 = por %p275, %p276
      %p278 = scmp.ne.s32.totalorder %s266, %s267
      %p279 = scmp.eq.s32.totalorder %s32, 2
      %p280 = por %p278, %p279
      %p282 = scmp.ne.s32.totalorder %s267, %s281
      %p283 = scmp.eq.s32.totalorder %s32, 0
      %p284 = por %p282, %p283
      %s286 = sadd.s32 %s285, 1
      %p289 = scmp.eq.s32.totalorder %s26, 2
      %p290 = scmp.ne.s32.totalorder %s285, %s287
      %p291 = scmp.eq.s32.totalorder %s26, 0
      %p292 = por %p290, %p291
      %p293 = scmp.ne.s32.totalorder %s285, %s287
      %p294 = scmp.eq.s32.totalorder %s31, 2
      %p295 = por %p293, %p294
      %p296 = scmp.ne.s32.totalorder %s287, %s288
      %p297 = scmp.eq.s32.totalorder %s31, 0
      %p298 = por %p296, %p297
      %p299 = scmp.ne.s32.totalorder %s287, %s288
      %p300 = scmp.eq.s32.totalorder %s32, 2
      %p301 = por %p299, %p300
      %p303 = scmp.ne.s32.totalorder %s288, %s302
      %p304 = scmp.eq.s32.totalorder %s32, 0
      %p305 = por %p303, %p304
      %s307 = sadd.s32 %s306, 1
      %p310 = scmp.eq.s32.totalorder %s26, 2
      %p311 = scmp.ne.s32.totalorder %s306, %s308
      %p312 = scmp.eq.s32.totalorder %s26, 0
      %p313 = por %p311, %p312
      %p314 = scmp.ne.s32.totalorder %s306, %s308
      %p315 = scmp.eq.s32.totalorder %s31, 2
      %p316 = por %p314, %p315
      %p317 = scmp.ne.s32.totalorder %s308, %s309
      %p318 = scmp.eq.s32.totalorder %s31, 0
      %p319 = por %p317, %p318
      %p320 = scmp.ne.s32.totalorder %s308, %s309
      %p321 = scmp.eq.s32.totalorder %s32, 2
      %p322 = por %p320, %p321
      %p324 = scmp.ne.s32.totalorder %s309, %s323
      %p325 = scmp.eq.s32.totalorder %s32, 0
      %p326 = por %p324, %p325
      %p327 = scmp.le.s32.totalorder 1, %s26
      %p328 = scmp.lt.s32.totalorder %s26, 4
      %p329 = pnand %p327, %p328
      %p330 = pneg %p329
      // Predicated region
      $region9: #{tpu_custom_call.1} parent=5 // pred_check
        _
      $region10: #{tpu_custom_call.1} parent=5 // pred_check_branch
        %332 = sbr.rel (%p329) target = $region12
      $region11: #{tpu_custom_call.1} parent=5 // pred_region
        %s333 = ssub.s32 %s26, 1
        // Predicated region
        $region13: #{tpu_custom_call.1} parent=11 // pred_check
          %p334 = pneg %p47
        $region14: #{tpu_custom_call.1} parent=11 // pred_check_branch
          %336 = sbr.rel (%p334) target = $region16
        $region15: #{tpu_custom_call.1} parent=11 // pred_region
          _
        $region16: #{tpu_custom_call.1} parent=11 // pred_fallthru
          _
        // Predicated region
        $region17: #{tpu_custom_call.1} parent=11 // pred_check
          %p337 = pneg %p68
        $region18: #{tpu_custom_call.1} parent=11 // pred_check_branch
          %339 = sbr.rel (%p337) target = $region20
        $region19: #{tpu_custom_call.1} parent=11 // pred_region
          _
        $region20: #{tpu_custom_call.1} parent=11 // pred_fallthru
          _
        // Predicated region
        $region21: #{tpu_custom_call.1} parent=11 // pred_check
          %p340 = pneg %p193
        $region22: #{tpu_custom_call.1} parent=11 // pred_check_branch
          %342 = sbr.rel (%p340) target = $region24
        $region23: #{tpu_custom_call.1} parent=11 // pred_region
          %344 = vsyncadd [#allocation8], 0
          %s345 = sshll.u32 %s6, 4
          %s346 = int_to_ptr.hbm [resolvable:$true] %s345
          %s347 = sshll.u32 [#allocation9], 4
          %s348 = int_to_ptr.vmem [resolvable:$true] %s347
          %353 = dma.hbm_to_vmem [thread:$0]  %s346, 8192, %s348, [#allocation8], 256, 256, 16
        $region24: #{tpu_custom_call.1} parent=11 // pred_fallthru
          _
        // Predicated region
        $region25: #{tpu_custom_call.1} parent=11 // pred_check
          %p354 = pneg %p214
        $region26: #{tpu_custom_call.1} parent=11 // pred_check_branch
          %356 = sbr.rel (%p354) target = $region28
        $region27: #{tpu_custom_call.1} parent=11 // pred_region
          _
        $region28: #{tpu_custom_call.1} parent=11 // pred_fallthru
          _
        // Predicated region
        $region29: #{tpu_custom_call.1} parent=11 // pred_check
          %p357 = pneg %p235
        $region30: #{tpu_custom_call.1} parent=11 // pred_check_branch
          %359 = sbr.rel (%p357) target = $region32
        $region31: #{tpu_custom_call.1} parent=11 // pred_region
          %361 = vsyncadd [#allocation11], 0
          %s362 = sshll.u32 %s8, 4
          %s363 = int_to_ptr.hbm [resolvable:$true] %s362
          %s364 = sshll.u32 [#allocation10], 4
          %s365 = int_to_ptr.vmem [resolvable:$true] %s364
          %370 = dma.hbm_to_vmem [thread:$0]  %s363, 8192, %s365, [#allocation11], 256, 256, 16
        $region32: #{tpu_custom_call.1} parent=11 // pred_fallthru
          _
        // Predicated region
        $region33: #{tpu_custom_call.1} parent=11 // pred_check
          %p371 = pneg %p256
        $region34: #{tpu_custom_call.1} parent=11 // pred_check_branch
          %373 = sbr.rel (%p371) target = $region36
        $region35: #{tpu_custom_call.1} parent=11 // pred_region
          _
        $region36: #{tpu_custom_call.1} parent=11 // pred_fallthru
          _
        // Predicated region
        $region37: #{tpu_custom_call.1} parent=11 // pred_check
          %p374 = pneg %p277
        $region38: #{tpu_custom_call.1} parent=11 // pred_check_branch
          %376 = sbr.rel (%p374) target = $region40
        $region39: #{tpu_custom_call.1} parent=11 // pred_region
          _
        $region40: #{tpu_custom_call.1} parent=11 // pred_fallthru
          _
        // Predicated region
        $region41: #{tpu_custom_call.1} parent=11 // pred_check
          %p377 = pneg %p298
        $region42: #{tpu_custom_call.1} parent=11 // pred_check_branch
          %379 = sbr.rel (%p377) target = $region44
        $region43: #{tpu_custom_call.1} parent=11 // pred_region
          _
        $region44: #{tpu_custom_call.1} parent=11 // pred_fallthru
          _
      $region12: #{tpu_custom_call.1} parent=5 // pred_fallthru
        _
      %p380 = scmp.lt.s32.totalorder %s26, 3
      // Predicated region
      $region45: #{tpu_custom_call.1} parent=5 // pred_check
        %p381 = pneg %p380
      $region46: #{tpu_custom_call.1} parent=5 // pred_check_branch
        %383 = sbr.rel (%p381) target = $region48
      $region47: #{tpu_custom_call.1} parent=5 // pred_region
        // Predicated region
        $region49: #{tpu_custom_call.1} parent=47 // pred_check
          %p384 = pneg %p88
        $region50: #{tpu_custom_call.1} parent=47 // pred_check_branch
          %386 = sbr.rel (%p384) target = $region52
        $region51: #{tpu_custom_call.1} parent=47 // pred_region
          %s387 = sand.u32 %s78, 1
          %s388 = scalar_lea.sflag [#allocation5], %s387
          %s389 = sand.u32 %s78, 1
          %s390 = smul.addr %s389, 512
          %s391 = scalar_lea.vmem [#allocation4], %s390
          %393 = vsyncadd %s388, 0
          %s394 = smul.addr %s26, 4
          %s395 = scalar_lea.hbm %s2, %s394
          %s396 = sshll.u32 %s395, 4
          %s397 = int_to_ptr.hbm [resolvable:$true] %s396
          %s398 = sshll.u32 %s391, 4
          %s399 = int_to_ptr.vmem [resolvable:$true] %s398
          %404 = dma.hbm_to_vmem [thread:$0]  %s397, 8192, %s399, %s388, 192, 64, 4
        $region52: #{tpu_custom_call.1} parent=47 // pred_fallthru
          _
        // Predicated region
        $region53: #{tpu_custom_call.1} parent=47 // pred_check
          %p405 = pneg %p114
        $region54: #{tpu_custom_call.1} parent=47 // pred_check_branch
          %407 = sbr.rel (%p405) target = $region56
        $region55: #{tpu_custom_call.1} parent=47 // pred_region
          %p408 = scmp.lt.s32.totalorder %s26, 2
          %s409 = scalar_select %p408, %s26, 2
          %s410 = scalar_lea.vmem %s3, %s409
        $region56: #{tpu_custom_call.1} parent=47 // pred_fallthru
          _
        // Predicated region
        $region57: #{tpu_custom_call.1} parent=47 // pred_check
          %p411 = pneg %p140
        $region58: #{tpu_custom_call.1} parent=47 // pred_check_branch
          %413 = sbr.rel (%p411) target = $region60
        $region59: #{tpu_custom_call.1} parent=47 // pred_region
          %s414 = sand.u32 %s26, 1
          %s415 = scalar_lea.sflag [#allocation8], %s414
          %s416 = sand.u32 %s130, 1
          %s417 = smul.addr %s416, 512
          %s418 = scalar_lea.vmem [#allocation7], %s417
          %420 = vsyncadd %s415, 0
          %s421 = smul.addr %s26, 4
          %s422 = scalar_lea.hbm %s4, %s421
          %s423 = sshll.u32 %s422, 4
          %s424 = int_to_ptr.hbm [resolvable:$true] %s423
          %s425 = sshll.u32 %s418, 4
          %s426 = int_to_ptr.vmem [resolvable:$true] %s425
          %431 = dma.hbm_to_vmem [thread:$0]  %s424, 8192, %s426, %s415, 192, 64, 4
        $region60: #{tpu_custom_call.1} parent=47 // pred_fallthru
          _
        // Predicated region
        $region61: #{tpu_custom_call.1} parent=47 // pred_check
          %p432 = pneg %p166
        $region62: #{tpu_custom_call.1} parent=47 // pred_check_branch
          %434 = sbr.rel (%p432) target = $region64
        $region63: #{tpu_custom_call.1} parent=47 // pred_region
          %p435 = scmp.lt.s32.totalorder %s26, 2
          %s436 = scalar_select %p435, %s26, 2
          %s437 = scalar_lea.vmem %s5, %s436
        $region64: #{tpu_custom_call.1} parent=47 // pred_fallthru
          _
      $region48: #{tpu_custom_call.1} parent=5 // pred_fallthru
        _
      %p438 = scmp.le.s32.totalorder 1, %s26
      %p439 = scmp.lt.s32.totalorder %s26, 4
      %p440 = pnand %p438, %p439
      %p441 = pneg %p440
      // Predicated region
      $region65: #{tpu_custom_call.1} parent=5 // pred_check
        _
      $region66: #{tpu_custom_call.1} parent=5 // pred_check_branch
        %443 = sbr.rel (%p440) target = $region68
      $region67: #{tpu_custom_call.1} parent=5 // pred_region
        %s444 = ssub.s32 %s26, 1
        %s445 = sand.u32 %s81, 1
        %s446 = scalar_lea.sflag [#allocation5], %s445
        %s447 = sand.u32 %s81, 1
        %s448 = smul.addr %s447, 512
        %s449 = scalar_lea.vmem [#allocation4], %s448
        // Predicated region
        $region69: #{tpu_custom_call.1} parent=67 // pred_check
          %p450 = pneg %p94
        $region70: #{tpu_custom_call.1} parent=67 // pred_check_branch
          %452 = sbr.rel (%p450) target = $region72
        $region71: #{tpu_custom_call.1} parent=67 // pred_region
          %454 = dma.done %s446, 8192
        $region72: #{tpu_custom_call.1} parent=67 // pred_fallthru
          _
        %s455 = sand.u32 %s31, 1
        %s456 = scalar_lea.sflag [#allocation8], %s455
        %s457 = sand.u32 %s133, 1
        %s458 = smul.addr %s457, 512
        %s459 = scalar_lea.vmem [#allocation7], %s458
        // Predicated region
        $region73: #{tpu_custom_call.1} parent=67 // pred_check
          %p460 = pneg %p146
        $region74: #{tpu_custom_call.1} parent=67 // pred_check_branch
          %462 = sbr.rel (%p460) target = $region76
        $region75: #{tpu_custom_call.1} parent=67 // pred_region
          %464 = dma.done %s456, 8192
        $region76: #{tpu_custom_call.1} parent=67 // pred_fallthru
          _
        // Predicated region
        $region77: #{tpu_custom_call.1} parent=67 // pred_check
          %p465 = pneg %p193
        $region78: #{tpu_custom_call.1} parent=67 // pred_check_branch
          %467 = sbr.rel (%p465) target = $region80
        $region79: #{tpu_custom_call.1} parent=67 // pred_region
          %469 = dma.done [#allocation8], 8192
        $region80: #{tpu_custom_call.1} parent=67 // pred_fallthru
          _
        // Predicated region
        $region81: #{tpu_custom_call.1} parent=67 // pred_check
          %p470 = pneg %p235
        $region82: #{tpu_custom_call.1} parent=67 // pred_check_branch
          %472 = sbr.rel (%p470) target = $region84
        $region83: #{tpu_custom_call.1} parent=67 // pred_region
          %474 = dma.done [#allocation11], 8192
        $region84: #{tpu_custom_call.1} parent=67 // pred_fallthru
          _
        %p475 = pneg %p47
        %p476 = pneg %p44
        %p477 = pneg %p68
        %p478 = pneg %p65
        %s479 = sand.u32 %s81, 1
        %s480 = scalar_lea.sflag [#allocation5], %s479
        %s481 = sand.u32 %s81, 1
        %s482 = smul.addr %s481, 512
        %s483 = scalar_lea.vmem [#allocation4], %s482
        %p484 = pneg %p94
        %p485 = pneg %p91
        %p486 = scmp.lt.s32.totalorder %s31, 2
        %s487 = scalar_select %p486, %s31, 2
        %s488 = scalar_lea.vmem %s3, %s487
        %p489 = pneg %p120
        %p490 = pneg %p117
        %s491 = sand.u32 %s31, 1
        %s492 = scalar_lea.sflag [#allocation8], %s491
        %s493 = sand.u32 %s133, 1
        %s494 = smul.addr %s493, 512
        %s495 = scalar_lea.vmem [#allocation7], %s494
        %p496 = pneg %p146
        %p497 = pneg %p143
        %p498 = scmp.lt.s32.totalorder %s31, 2
        %s499 = scalar_select %p498, %s31, 2
        %s500 = scalar_lea.vmem %s5, %s499
        %p501 = pneg %p172
        %p502 = pneg %p169
        %p503 = pneg %p193
        %p504 = pneg %p190
        %p505 = pneg %p214
        %p506 = pneg %p211
        %p507 = pneg %p235
        %p508 = pneg %p232
        %p509 = pneg %p256
        %p510 = pneg %p253
        %p511 = pneg %p277
        %p512 = pneg %p274
        %p513 = pneg %p298
        %p514 = pneg %p295
        %p515 = pneg %p319
        %p516 = pneg %p316
        %p517 = scmp.lt.s32.totalorder %s31, 2
        %s518 = scalar_select %p517, %s31, 2
        %s519 = scalar_lea.vmem %s3, %s518
        %p520 = scmp.lt.s32.totalorder %s31, 2
        %s521 = scalar_select %p520, %s31, 2
        %s522 = scalar_lea.vmem %s5, %s521
        %v523 = vld [vmem:[%s0] sm:$0xff]
        %v524 = vld [vmem:[%s0 + $0x8] sm:$0xff]
        %v525 = vld [vmem:[%s0 + $0x10] sm:$0xff]
        %v526 = vld [vmem:[%s0 + $0x18] sm:$0xff]
        %v527 = vld [vmem:[%s0 + $0x20] sm:$0xff]
        %v528 = vld [vmem:[%s0 + $0x28] sm:$0xff]
        %v529 = vld [vmem:[%s0 + $0x30] sm:$0xff]
        %v530 = vld [vmem:[%s0 + $0x38] sm:$0xff]
        %v531 = vpack.c.bf16 %v523, %v523
        %v532 = vpack.c.bf16 %v524, %v524
        %v533 = vpack.c.bf16 %v525, %v525
        %v534 = vpack.c.bf16 %v526, %v526
        %v535 = vpack.c.bf16 %v527, %v527
        %v536 = vpack.c.bf16 %v528, %v528
        %v537 = vpack.c.bf16 %v529, %v529
        %v538 = vpack.c.bf16 %v530, %v530
        %v539 = vld [vmem:[%s1] sm:$0xff]
        %v540 = vld [vmem:[%s1 + $0x8] sm:$0xff]
        %v541 = vld [vmem:[%s1 + $0x10] sm:$0xff]
        %v542 = vld [vmem:[%s1 + $0x18] sm:$0xff]
        %v543 = vld [vmem:[%s1 + $0x20] sm:$0xff]
        %v544 = vld [vmem:[%s1 + $0x28] sm:$0xff]
        %v545 = vld [vmem:[%s1 + $0x30] sm:$0xff]
        %v546 = vld [vmem:[%s1 + $0x38] sm:$0xff]
        %v547 = vpack.c.bf16 %v539, %v539
        %v548 = vpack.c.bf16 %v540, %v540
        %v549 = vpack.c.bf16 %v541, %v541
        %v550 = vpack.c.bf16 %v542, %v542
        %v551 = vpack.c.bf16 %v543, %v543
        %v552 = vpack.c.bf16 %v544, %v544
        %v553 = vpack.c.bf16 %v545, %v545
        %v554 = vpack.c.bf16 %v546, %v546
        %v555 = vld [vmem:[%s449] sm:$0xf]
        %v556 = vld [vmem:[%s449 + $0x4] sm:$0xf]
        %v557 = vld [vmem:[%s449 + $0x8] sm:$0xf]
        %v558 = vld [vmem:[%s449 + $0xc] sm:$0xf]
        %v559 = vld [vmem:[%s449 + $0x10] sm:$0xf]
        %v560 = vld [vmem:[%s449 + $0x14] sm:$0xf]
        %v561 = vld [vmem:[%s449 + $0x18] sm:$0xf]
        %v562 = vld [vmem:[%s449 + $0x1c] sm:$0xf]
        %v563 = vld [vmem:[%s449 + $0x20] sm:$0xf]
        %v564 = vld [vmem:[%s449 + $0x24] sm:$0xf]
        %v565 = vld [vmem:[%s449 + $0x28] sm:$0xf]
        %v566 = vld [vmem:[%s449 + $0x2c] sm:$0xf]
        %v567 = vld [vmem:[%s449 + $0x30] sm:$0xf]
        %v568 = vld [vmem:[%s449 + $0x34] sm:$0xf]
        %v569 = vld [vmem:[%s449 + $0x38] sm:$0xf]
        %v570 = vld [vmem:[%s449 + $0x3c] sm:$0xf]
        %v571 = vld [vmem:[%s449 + $0x40] sm:$0xf]
        %v572 = vld [vmem:[%s449 + $0x44] sm:$0xf]
        %v573 = vld [vmem:[%s449 + $0x48] sm:$0xf]
        %v574 = vld [vmem:[%s449 + $0x4c] sm:$0xf]
        %v575 = vld [vmem:[%s449 + $0x50] sm:$0xf]
        %v576 = vld [vmem:[%s449 + $0x54] sm:$0xf]
        %v577 = vld [vmem:[%s449 + $0x58] sm:$0xf]
        %v578 = vld [vmem:[%s449 + $0x5c] sm:$0xf]
        %v579 = vld [vmem:[%s449 + $0x60] sm:$0xf]
        %v580 = vld [vmem:[%s449 + $0x64] sm:$0xf]
        %v581 = vld [vmem:[%s449 + $0x68] sm:$0xf]
        %v582 = vld [vmem:[%s449 + $0x6c] sm:$0xf]
        %v583 = vld [vmem:[%s449 + $0x70] sm:$0xf]
        %v584 = vld [vmem:[%s449 + $0x74] sm:$0xf]
        %v585 = vld [vmem:[%s449 + $0x78] sm:$0xf]
        %v586 = vld [vmem:[%s449 + $0x7c] sm:$0xf]
        %v587 = vld [vmem:[%s449 + $0x80] sm:$0xf]
        %v588 = vld [vmem:[%s449 + $0x84] sm:$0xf]
        %v589 = vld [vmem:[%s449 + $0x88] sm:$0xf]
        %v590 = vld [vmem:[%s449 + $0x8c] sm:$0xf]
        %v591 = vld [vmem:[%s449 + $0x90] sm:$0xf]
        %v592 = vld [vmem:[%s449 + $0x94] sm:$0xf]
        %v593 = vld [vmem:[%s449 + $0x98] sm:$0xf]
        %v594 = vld [vmem:[%s449 + $0x9c] sm:$0xf]
        %v595 = vld [vmem:[%s449 + $0xa0] sm:$0xf]
        %v596 = vld [vmem:[%s449 + $0xa4] sm:$0xf]
        %v597 = vld [vmem:[%s449 + $0xa8] sm:$0xf]
        %v598 = vld [vmem:[%s449 + $0xac] sm:$0xf]
        %v599 = vld [vmem:[%s449 + $0xb0] sm:$0xf]
        %v600 = vld [vmem:[%s449 + $0xb4] sm:$0xf]
        %v601 = vld [vmem:[%s449 + $0xb8] sm:$0xf]
        %v602 = vld [vmem:[%s449 + $0xbc] sm:$0xf]
        %v603 = vld [vmem:[%s449 + $0xc0] sm:$0xf]
        %v604 = vld [vmem:[%s449 + $0xc4] sm:$0xf]
        %v605 = vld [vmem:[%s449 + $0xc8] sm:$0xf]
        %v606 = vld [vmem:[%s449 + $0xcc] sm:$0xf]
        %v607 = vld [vmem:[%s449 + $0xd0] sm:$0xf]
        %v608 = vld [vmem:[%s449 + $0xd4] sm:$0xf]
        %v609 = vld [vmem:[%s449 + $0xd8] sm:$0xf]
        %v610 = vld [vmem:[%s449 + $0xdc] sm:$0xf]
        %v611 = vld [vmem:[%s449 + $0xe0] sm:$0xf]
        %v612 = vld [vmem:[%s449 + $0xe4] sm:$0xf]
        %v613 = vld [vmem:[%s449 + $0xe8] sm:$0xf]
        %v614 = vld [vmem:[%s449 + $0xec] sm:$0xf]
        %v615 = vld [vmem:[%s449 + $0xf0] sm:$0xf]
        %v616 = vld [vmem:[%s449 + $0xf4] sm:$0xf]
        %v617 = vld [vmem:[%s449 + $0xf8] sm:$0xf]
        %v618 = vld [vmem:[%s449 + $0xfc] sm:$0xf]
        %v619 = vld [vmem:[%s449 + $0x100] sm:$0xf]
        %v620 = vld [vmem:[%s449 + $0x104] sm:$0xf]
        %v621 = vld [vmem:[%s449 + $0x108] sm:$0xf]
        %v622 = vld [vmem:[%s449 + $0x10c] sm:$0xf]
        %v623 = vld [vmem:[%s449 + $0x110] sm:$0xf]
        %v624 = vld [vmem:[%s449 + $0x114] sm:$0xf]
        %v625 = vld [vmem:[%s449 + $0x118] sm:$0xf]
        %v626 = vld [vmem:[%s449 + $0x11c] sm:$0xf]
        %v627 = vld [vmem:[%s449 + $0x120] sm:$0xf]
        %v628 = vld [vmem:[%s449 + $0x124] sm:$0xf]
        %v629 = vld [vmem:[%s449 + $0x128] sm:$0xf]
        %v630 = vld [vmem:[%s449 + $0x12c] sm:$0xf]
        %v631 = vld [vmem:[%s449 + $0x130] sm:$0xf]
        %v632 = vld [vmem:[%s449 + $0x134] sm:$0xf]
        %v633 = vld [vmem:[%s449 + $0x138] sm:$0xf]
        %v634 = vld [vmem:[%s449 + $0x13c] sm:$0xf]
        %v635 = vld [vmem:[%s449 + $0x140] sm:$0xf]
        %v636 = vld [vmem:[%s449 + $0x144] sm:$0xf]
        %v637 = vld [vmem:[%s449 + $0x148] sm:$0xf]
        %v638 = vld [vmem:[%s449 + $0x14c] sm:$0xf]
        %v639 = vld [vmem:[%s449 + $0x150] sm:$0xf]
        %v640 = vld [vmem:[%s449 + $0x154] sm:$0xf]
        %v641 = vld [vmem:[%s449 + $0x158] sm:$0xf]
        %v642 = vld [vmem:[%s449 + $0x15c] sm:$0xf]
        %v643 = vld [vmem:[%s449 + $0x160] sm:$0xf]
        %v644 = vld [vmem:[%s449 + $0x164] sm:$0xf]
        %v645 = vld [vmem:[%s449 + $0x168] sm:$0xf]
        %v646 = vld [vmem:[%s449 + $0x16c] sm:$0xf]
        %v647 = vld [vmem:[%s449 + $0x170] sm:$0xf]
        %v648 = vld [vmem:[%s449 + $0x174] sm:$0xf]
        %v649 = vld [vmem:[%s449 + $0x178] sm:$0xf]
        %v650 = vld [vmem:[%s449 + $0x17c] sm:$0xf]
        %v651 = vld [vmem:[%s449 + $0x180] sm:$0xf]
        %v652 = vld [vmem:[%s449 + $0x184] sm:$0xf]
        %v653 = vld [vmem:[%s449 + $0x188] sm:$0xf]
        %v654 = vld [vmem:[%s449 + $0x18c] sm:$0xf]
        %v655 = vld [vmem:[%s449 + $0x190] sm:$0xf]
        %v656 = vld [vmem:[%s449 + $0x194] sm:$0xf]
        %v657 = vld [vmem:[%s449 + $0x198] sm:$0xf]
        %v658 = vld [vmem:[%s449 + $0x19c] sm:$0xf]
        %v659 = vld [vmem:[%s449 + $0x1a0] sm:$0xf]
        %v660 = vld [vmem:[%s449 + $0x1a4] sm:$0xf]
        %v661 = vld [vmem:[%s449 + $0x1a8] sm:$0xf]
        %v662 = vld [vmem:[%s449 + $0x1ac] sm:$0xf]
        %v663 = vld [vmem:[%s449 + $0x1b0] sm:$0xf]
        %v664 = vld [vmem:[%s449 + $0x1b4] sm:$0xf]
        %v665 = vld [vmem:[%s449 + $0x1b8] sm:$0xf]
        %v666 = vld [vmem:[%s449 + $0x1bc] sm:$0xf]
        %v667 = vld [vmem:[%s449 + $0x1c0] sm:$0xf]
        %v668 = vld [vmem:[%s449 + $0x1c4] sm:$0xf]
        %v669 = vld [vmem:[%s449 + $0x1c8] sm:$0xf]
        %v670 = vld [vmem:[%s449 + $0x1cc] sm:$0xf]
        %v671 = vld [vmem:[%s449 + $0x1d0] sm:$0xf]
        %v672 = vld [vmem:[%s449 + $0x1d4] sm:$0xf]
        %v673 = vld [vmem:[%s449 + $0x1d8] sm:$0xf]
        %v674 = vld [vmem:[%s449 + $0x1dc] sm:$0xf]
        %v675 = vld [vmem:[%s449 + $0x1e0] sm:$0xf]
        %v676 = vld [vmem:[%s449 + $0x1e4] sm:$0xf]
        %v677 = vld [vmem:[%s449 + $0x1e8] sm:$0xf]
        %v678 = vld [vmem:[%s449 + $0x1ec] sm:$0xf]
        %v679 = vld [vmem:[%s449 + $0x1f0] sm:$0xf]
        %v680 = vld [vmem:[%s449 + $0x1f4] sm:$0xf]
        %v681 = vld [vmem:[%s449 + $0x1f8] sm:$0xf]
        %v682 = vld [vmem:[%s449 + $0x1fc] sm:$0xf]
        %v683 = vld [vmem:[%s519] sm:$0x1]
        %v685 = vperm.slane %v683, 0
        %v815 = vunpack.c.l.b16 %v555
        %v816 = vunpack.c.l.b16 %v556
        %v817 = vunpack.c.l.b16 %v557
        %v818 = vunpack.c.l.b16 %v558
        %v819 = vunpack.c.l.b16 %v559
        %v820 = vunpack.c.l.b16 %v560
        %v821 = vunpack.c.l.b16 %v561
        %v822 = vunpack.c.l.b16 %v562
        %v823 = vunpack.c.l.b16 %v563
        %v824 = vunpack.c.l.b16 %v564
        %v825 = vunpack.c.l.b16 %v565
        %v826 = vunpack.c.l.b16 %v566
        %v827 = vunpack.c.l.b16 %v567
        %v828 = vunpack.c.l.b16 %v568
        %v829 = vunpack.c.l.b16 %v569
        %v830 = vunpack.c.l.b16 %v570
        %v831 = vunpack.c.l.b16 %v571
        %v832 = vunpack.c.l.b16 %v572
        %v833 = vunpack.c.l.b16 %v573
        %v834 = vunpack.c.l.b16 %v574
        %v835 = vunpack.c.l.b16 %v575
        %v836 = vunpack.c.l.b16 %v576
        %v837 = vunpack.c.l.b16 %v577
        %v838 = vunpack.c.l.b16 %v578
        %v839 = vunpack.c.l.b16 %v579
        %v840 = vunpack.c.l.b16 %v580
        %v841 = vunpack.c.l.b16 %v581
        %v842 = vunpack.c.l.b16 %v582
        %v843 = vunpack.c.l.b16 %v583
        %v844 = vunpack.c.l.b16 %v584
        %v845 = vunpack.c.l.b16 %v585
        %v846 = vunpack.c.l.b16 %v586
        %v847 = vunpack.c.l.b16 %v587
        %v848 = vunpack.c.l.b16 %v588
        %v849 = vunpack.c.l.b16 %v589
        %v850 = vunpack.c.l.b16 %v590
        %v851 = vunpack.c.l.b16 %v591
        %v852 = vunpack.c.l.b16 %v592
        %v853 = vunpack.c.l.b16 %v593
        %v854 = vunpack.c.l.b16 %v594
        %v855 = vunpack.c.l.b16 %v595
        %v856 = vunpack.c.l.b16 %v596
        %v857 = vunpack.c.l.b16 %v597
        %v858 = vunpack.c.l.b16 %v598
        %v859 = vunpack.c.l.b16 %v599
        %v860 = vunpack.c.l.b16 %v600
        %v861 = vunpack.c.l.b16 %v601
        %v862 = vunpack.c.l.b16 %v602
        %v863 = vunpack.c.l.b16 %v603
        %v864 = vunpack.c.l.b16 %v604
        %v865 = vunpack.c.l.b16 %v605
        %v866 = vunpack.c.l.b16 %v606
        %v867 = vunpack.c.l.b16 %v607
        %v868 = vunpack.c.l.b16 %v608
        %v869 = vunpack.c.l.b16 %v609
        %v870 = vunpack.c.l.b16 %v610
        %v871 = vunpack.c.l.b16 %v611
        %v872 = vunpack.c.l.b16 %v612
        %v873 = vunpack.c.l.b16 %v613
        %v874 = vunpack.c.l.b16 %v614
        %v875 = vunpack.c.l.b16 %v615
        %v876 = vunpack.c.l.b16 %v616
        %v877 = vunpack.c.l.b16 %v617
        %v878 = vunpack.c.l.b16 %v618
        %v879 = vunpack.c.l.b16 %v619
        %v880 = vunpack.c.l.b16 %v620
        %v881 = vunpack.c.l.b16 %v621
        %v882 = vunpack.c.l.b16 %v622
        %v883 = vunpack.c.l.b16 %v623
        %v884 = vunpack.c.l.b16 %v624
        %v885 = vunpack.c.l.b16 %v625
        %v886 = vunpack.c.l.b16 %v626
        %v887 = vunpack.c.l.b16 %v627
        %v888 = vunpack.c.l.b16 %v628
        %v889 = vunpack.c.l.b16 %v629
        %v890 = vunpack.c.l.b16 %v630
        %v891 = vunpack.c.l.b16 %v631
        %v892 = vunpack.c.l.b16 %v632
        %v893 = vunpack.c.l.b16 %v633
        %v894 = vunpack.c.l.b16 %v634
        %v895 = vunpack.c.l.b16 %v635
        %v896 = vunpack.c.l.b16 %v636
        %v897 = vunpack.c.l.b16 %v637
        %v898 = vunpack.c.l.b16 %v638
        %v899 = vunpack.c.l.b16 %v639
        %v900 = vunpack.c.l.b16 %v640
        %v901 = vunpack.c.l.b16 %v641
        %v902 = vunpack.c.l.b16 %v642
        %v903 = vunpack.c.l.b16 %v643
        %v904 = vunpack.c.l.b16 %v644
        %v905 = vunpack.c.l.b16 %v645
        %v906 = vunpack.c.l.b16 %v646
        %v907 = vunpack.c.l.b16 %v647
        %v908 = vunpack.c.l.b16 %v648
        %v909 = vunpack.c.l.b16 %v649
        %v910 = vunpack.c.l.b16 %v650
        %v911 = vunpack.c.l.b16 %v651
        %v912 = vunpack.c.l.b16 %v652
        %v913 = vunpack.c.l.b16 %v653
        %v914 = vunpack.c.l.b16 %v654
        %v915 = vunpack.c.l.b16 %v655
        %v916 = vunpack.c.l.b16 %v656
        %v917 = vunpack.c.l.b16 %v657
        %v918 = vunpack.c.l.b16 %v658
        %v919 = vunpack.c.l.b16 %v659
        %v920 = vunpack.c.l.b16 %v660
        %v921 = vunpack.c.l.b16 %v661
        %v922 = vunpack.c.l.b16 %v662
        %v923 = vunpack.c.l.b16 %v663
        %v924 = vunpack.c.l.b16 %v664
        %v925 = vunpack.c.l.b16 %v665
        %v926 = vunpack.c.l.b16 %v666
        %v927 = vunpack.c.l.b16 %v667
        %v928 = vunpack.c.l.b16 %v668
        %v929 = vunpack.c.l.b16 %v669
        %v930 = vunpack.c.l.b16 %v670
        %v931 = vunpack.c.l.b16 %v671
        %v932 = vunpack.c.l.b16 %v672
        %v933 = vunpack.c.l.b16 %v673
        %v934 = vunpack.c.l.b16 %v674
        %v935 = vunpack.c.l.b16 %v675
        %v936 = vunpack.c.l.b16 %v676
        %v937 = vunpack.c.l.b16 %v677
        %v938 = vunpack.c.l.b16 %v678
        %v939 = vunpack.c.l.b16 %v679
        %v940 = vunpack.c.l.b16 %v680
        %v941 = vunpack.c.l.b16 %v681
        %v942 = vunpack.c.l.b16 %v682
        %v943 = vpack.c.b16 %v816, %v815
        %v944 = vpack.c.b16 %v818, %v817
        %v945 = vpack.c.b16 %v820, %v819
        %v946 = vpack.c.b16 %v822, %v821
        %v947 = vpack.c.b16 %v824, %v823
        %v948 = vpack.c.b16 %v826, %v825
        %v949 = vpack.c.b16 %v828, %v827
        %v950 = vpack.c.b16 %v830, %v829
        %v951 = vpack.c.b16 %v832, %v831
        %v952 = vpack.c.b16 %v834, %v833
        %v953 = vpack.c.b16 %v836, %v835
        %v954 = vpack.c.b16 %v838, %v837
        %v955 = vpack.c.b16 %v840, %v839
        %v956 = vpack.c.b16 %v842, %v841
        %v957 = vpack.c.b16 %v844, %v843
        %v958 = vpack.c.b16 %v846, %v845
        %v959 = vpack.c.b16 %v848, %v847
        %v960 = vpack.c.b16 %v850, %v849
        %v961 = vpack.c.b16 %v852, %v851
        %v962 = vpack.c.b16 %v854, %v853
        %v963 = vpack.c.b16 %v856, %v855
        %v964 = vpack.c.b16 %v858, %v857
        %v965 = vpack.c.b16 %v860, %v859
        %v966 = vpack.c.b16 %v862, %v861
        %v967 = vpack.c.b16 %v864, %v863
        %v968 = vpack.c.b16 %v866, %v865
        %v969 = vpack.c.b16 %v868, %v867
        %v970 = vpack.c.b16 %v870, %v869
        %v971 = vpack.c.b16 %v872, %v871
        %v972 = vpack.c.b16 %v874, %v873
        %v973 = vpack.c.b16 %v876, %v875
        %v974 = vpack.c.b16 %v878, %v877
        %v975 = vpack.c.b16 %v880, %v879
        %v976 = vpack.c.b16 %v882, %v881
        %v977 = vpack.c.b16 %v884, %v883
        %v978 = vpack.c.b16 %v886, %v885
        %v979 = vpack.c.b16 %v888, %v887
        %v980 = vpack.c.b16 %v890, %v889
        %v981 = vpack.c.b16 %v892, %v891
        %v982 = vpack.c.b16 %v894, %v893
        %v983 = vpack.c.b16 %v896, %v895
        %v984 = vpack.c.b16 %v898, %v897
        %v985 = vpack.c.b16 %v900, %v899
        %v986 = vpack.c.b16 %v902, %v901
        %v987 = vpack.c.b16 %v904, %v903
        %v988 = vpack.c.b16 %v906, %v905
        %v989 = vpack.c.b16 %v908, %v907
        %v990 = vpack.c.b16 %v910, %v909
        %v991 = vpack.c.b16 %v912, %v911
        %v992 = vpack.c.b16 %v914, %v913
        %v993 = vpack.c.b16 %v916, %v915
        %v994 = vpack.c.b16 %v918, %v917
        %v995 = vpack.c.b16 %v920, %v919
        %v996 = vpack.c.b16 %v922, %v921
        %v997 = vpack.c.b16 %v924, %v923
        %v998 = vpack.c.b16 %v926, %v925
        %v999 = vpack.c.b16 %v928, %v927
        %v1000 = vpack.c.b16 %v930, %v929
        %v1001 = vpack.c.b16 %v932, %v931
        %v1002 = vpack.c.b16 %v934, %v933
        %v1003 = vpack.c.b16 %v936, %v935
        %v1004 = vpack.c.b16 %v938, %v937
        %v1005 = vpack.c.b16 %v940, %v939
        %v1006 = vpack.c.b16 %v942, %v941
        %1071 = vmatpush.bf16.msra.mxu0 %v950
        %1072 = vmatpush.bf16.msra.mxu0 %v949
        %1073 = vmatpush.bf16.msra.mxu0 %v948
        %1074 = vmatpush.bf16.msra.mxu0 %v947
        %1075 = vmatpush.bf16.msra.mxu0 %v946
        %1076 = vmatpush.bf16.msra.mxu0 %v945
        %1077 = vmatpush.bf16.msra.mxu0 %v944
        %1078 = vmatpush.bf16.msra.mxu0 %v943
        %1079 = vmatmul.bf16.gmra.mxu0 %v531
        %v1080 = vpop.f32.mrf.mxu0
        %v1081 = vadd.f32 %v685, %v1080
        %v1082 = vpop.f32.mrf.mxu0
        %1083 = vdwg.mxu0
        %1084 = vmatpush.bf16.msra.mxu0 %v958
        %1085 = vmatpush.bf16.msra.mxu0 %v957
        %1086 = vmatpush.bf16.msra.mxu0 %v956
        %1087 = vmatpush.bf16.msra.mxu0 %v955
        %1088 = vmatpush.bf16.msra.mxu0 %v954
        %1089 = vmatpush.bf16.msra.mxu0 %v953
        %1090 = vmatpush.bf16.msra.mxu0 %v952
        %1091 = vmatpush.bf16.msra.mxu0 %v951
        %1092 = vmatmul.bf16.gmra.mxu0 %v532
        %v1093 = vpop.f32.mrf.mxu0
        %v1094 = vadd.f32 %v1081, %v1093
        %v1095 = vpop.f32.mrf.mxu0
        %1096 = vdwg.mxu0
        %1097 = vmatpush.bf16.msra.mxu0 %v966
        %1098 = vmatpush.bf16.msra.mxu0 %v965
        %1099 = vmatpush.bf16.msra.mxu0 %v964
        %1100 = vmatpush.bf16.msra.mxu0 %v963
        %1101 = vmatpush.bf16.msra.mxu0 %v962
        %1102 = vmatpush.bf16.msra.mxu0 %v961
        %1103 = vmatpush.bf16.msra.mxu0 %v960
        %1104 = vmatpush.bf16.msra.mxu0 %v959
        %1105 = vmatmul.bf16.gmra.mxu0 %v533
        %v1106 = vpop.f32.mrf.mxu0
        %v1107 = vadd.f32 %v1094, %v1106
        %v1108 = vpop.f32.mrf.mxu0
        %1109 = vdwg.mxu0
        %1110 = vmatpush.bf16.msra.mxu0 %v974
        %1111 = vmatpush.bf16.msra.mxu0 %v973
        %1112 = vmatpush.bf16.msra.mxu0 %v972
        %1113 = vmatpush.bf16.msra.mxu0 %v971
        %1114 = vmatpush.bf16.msra.mxu0 %v970
        %1115 = vmatpush.bf16.msra.mxu0 %v969
        %1116 = vmatpush.bf16.msra.mxu0 %v968
        %1117 = vmatpush.bf16.msra.mxu0 %v967
        %1118 = vmatmul.bf16.gmra.mxu0 %v534
        %v1119 = vpop.f32.mrf.mxu0
        %v1120 = vadd.f32 %v1107, %v1119
        %v1121 = vpop.f32.mrf.mxu0
        %1122 = vdwg.mxu0
        %1123 = vmatpush.bf16.msra.mxu0 %v982
        %1124 = vmatpush.bf16.msra.mxu0 %v981
        %1125 = vmatpush.bf16.msra.mxu0 %v980
        %1126 = vmatpush.bf16.msra.mxu0 %v979
        %1127 = vmatpush.bf16.msra.mxu0 %v978
        %1128 = vmatpush.bf16.msra.mxu0 %v977
        %1129 = vmatpush.bf16.msra.mxu0 %v976
        %1130 = vmatpush.bf16.msra.mxu0 %v975
        %1131 = vmatmul.bf16.gmra.mxu0 %v535
        %v1132 = vpop.f32.mrf.mxu0
        %v1133 = vadd.f32 %v1120, %v1132
        %v1134 = vpop.f32.mrf.mxu0
        %1135 = vdwg.mxu0
        %1136 = vmatpush.bf16.msra.mxu0 %v990
        %1137 = vmatpush.bf16.msra.mxu0 %v989
        %1138 = vmatpush.bf16.msra.mxu0 %v988
        %1139 = vmatpush.bf16.msra.mxu0 %v987
        %1140 = vmatpush.bf16.msra.mxu0 %v986
        %1141 = vmatpush.bf16.msra.mxu0 %v985
        %1142 = vmatpush.bf16.msra.mxu0 %v984
        %1143 = vmatpush.bf16.msra.mxu0 %v983
        %1144 = vmatmul.bf16.gmra.mxu0 %v536
        %v1145 = vpop.f32.mrf.mxu0
        %v1146 = vadd.f32 %v1133, %v1145
        %v1147 = vpop.f32.mrf.mxu0
        %1148 = vdwg.mxu0
        %1149 = vmatpush.bf16.msra.mxu0 %v998
        %1150 = vmatpush.bf16.msra.mxu0 %v997
        %1151 = vmatpush.bf16.msra.mxu0 %v996
        %1152 = vmatpush.bf16.msra.mxu0 %v995
        %1153 = vmatpush.bf16.msra.mxu0 %v994
        %1154 = vmatpush.bf16.msra.mxu0 %v993
        %1155 = vmatpush.bf16.msra.mxu0 %v992
        %1156 = vmatpush.bf16.msra.mxu0 %v991
        %1157 = vmatmul.bf16.gmra.mxu0 %v537
        %v1158 = vpop.f32.mrf.mxu0
        %v1159 = vadd.f32 %v1146, %v1158
        %v1160 = vpop.f32.mrf.mxu0
        %1161 = vdwg.mxu0
        %1162 = vmatpush.bf16.msra.mxu0 %v1006
        %1163 = vmatpush.bf16.msra.mxu0 %v1005
        %1164 = vmatpush.bf16.msra.mxu0 %v1004
        %1165 = vmatpush.bf16.msra.mxu0 %v1003
        %1166 = vmatpush.bf16.msra.mxu0 %v1002
        %1167 = vmatpush.bf16.msra.mxu0 %v1001
        %1168 = vmatpush.bf16.msra.mxu0 %v1000
        %1169 = vmatpush.bf16.msra.mxu0 %v999
        %1170 = vmatmul.bf16.gmra.mxu0 %v538
        %v1171 = vpop.f32.mrf.mxu0
        %v1172 = vadd.f32 %v1159, %v1171
        %v1173 = vpop.f32.mrf.mxu0
        %1174 = vdwg.mxu0
        %s1175 = smul.u32 %s31, 8
        %s1176 = scalar_lea.vmem [#allocation2], %s1175
        %1177 = vst [vmem:[%s1176] sm:$0xff] %v1172
        %v1178 = vld [vmem:[%s459] sm:$0xf]
        %v1179 = vld [vmem:[%s459 + $0x4] sm:$0xf]
        %v1180 = vld [vmem:[%s459 + $0x8] sm:$0xf]
        %v1181 = vld [vmem:[%s459 + $0xc] sm:$0xf]
        %v1182 = vld [vmem:[%s459 + $0x10] sm:$0xf]
        %v1183 = vld [vmem:[%s459 + $0x14] sm:$0xf]
        %v1184 = vld [vmem:[%s459 + $0x18] sm:$0xf]
        %v1185 = vld [vmem:[%s459 + $0x1c] sm:$0xf]
        %v1186 = vld [vmem:[%s459 + $0x20] sm:$0xf]
        %v1187 = vld [vmem:[%s459 + $0x24] sm:$0xf]
        %v1188 = vld [vmem:[%s459 + $0x28] sm:$0xf]
        %v1189 = vld [vmem:[%s459 + $0x2c] sm:$0xf]
        %v1190 = vld [vmem:[%s459 + $0x30] sm:$0xf]
        %v1191 = vld [vmem:[%s459 + $0x34] sm:$0xf]
        %v1192 = vld [vmem:[%s459 + $0x38] sm:$0xf]
        %v1193 = vld [vmem:[%s459 + $0x3c] sm:$0xf]
        %v1194 = vld [vmem:[%s459 + $0x40] sm:$0xf]
        %v1195 = vld [vmem:[%s459 + $0x44] sm:$0xf]
        %v1196 = vld [vmem:[%s459 + $0x48] sm:$0xf]
        %v1197 = vld [vmem:[%s459 + $0x4c] sm:$0xf]
        %v1198 = vld [vmem:[%s459 + $0x50] sm:$0xf]
        %v1199 = vld [vmem:[%s459 + $0x54] sm:$0xf]
        %v1200 = vld [vmem:[%s459 + $0x58] sm:$0xf]
        %v1201 = vld [vmem:[%s459 + $0x5c] sm:$0xf]
        %v1202 = vld [vmem:[%s459 + $0x60] sm:$0xf]
        %v1203 = vld [vmem:[%s459 + $0x64] sm:$0xf]
        %v1204 = vld [vmem:[%s459 + $0x68] sm:$0xf]
        %v1205 = vld [vmem:[%s459 + $0x6c] sm:$0xf]
        %v1206 = vld [vmem:[%s459 + $0x70] sm:$0xf]
        %v1207 = vld [vmem:[%s459 + $0x74] sm:$0xf]
        %v1208 = vld [vmem:[%s459 + $0x78] sm:$0xf]
        %v1209 = vld [vmem:[%s459 + $0x7c] sm:$0xf]
        %v1210 = vld [vmem:[%s459 + $0x80] sm:$0xf]
        %v1211 = vld [vmem:[%s459 + $0x84] sm:$0xf]
        %v1212 = vld [vmem:[%s459 + $0x88] sm:$0xf]
        %v1213 = vld [vmem:[%s459 + $0x8c] sm:$0xf]
        %v1214 = vld [vmem:[%s459 + $0x90] sm:$0xf]
        %v1215 = vld [vmem:[%s459 + $0x94] sm:$0xf]
        %v1216 = vld [vmem:[%s459 + $0x98] sm:$0xf]
        %v1217 = vld [vmem:[%s459 + $0x9c] sm:$0xf]
        %v1218 = vld [vmem:[%s459 + $0xa0] sm:$0xf]
        %v1219 = vld [vmem:[%s459 + $0xa4] sm:$0xf]
        %v1220 = vld [vmem:[%s459 + $0xa8] sm:$0xf]
        %v1221 = vld [vmem:[%s459 + $0xac] sm:$0xf]
        %v1222 = vld [vmem:[%s459 + $0xb0] sm:$0xf]
        %v1223 = vld [vmem:[%s459 + $0xb4] sm:$0xf]
        %v1224 = vld [vmem:[%s459 + $0xb8] sm:$0xf]
        %v1225 = vld [vmem:[%s459 + $0xbc] sm:$0xf]
        %v1226 = vld [vmem:[%s459 + $0xc0] sm:$0xf]
        %v1227 = vld [vmem:[%s459 + $0xc4] sm:$0xf]
        %v1228 = vld [vmem:[%s459 + $0xc8] sm:$0xf]
        %v1229 = vld [vmem:[%s459 + $0xcc] sm:$0xf]
        %v1230 = vld [vmem:[%s459 + $0xd0] sm:$0xf]
        %v1231 = vld [vmem:[%s459 + $0xd4] sm:$0xf]
        %v1232 = vld [vmem:[%s459 + $0xd8] sm:$0xf]
        %v1233 = vld [vmem:[%s459 + $0xdc] sm:$0xf]
        %v1234 = vld [vmem:[%s459 + $0xe0] sm:$0xf]
        %v1235 = vld [vmem:[%s459 + $0xe4] sm:$0xf]
        %v1236 = vld [vmem:[%s459 + $0xe8] sm:$0xf]
        %v1237 = vld [vmem:[%s459 + $0xec] sm:$0xf]
        %v1238 = vld [vmem:[%s459 + $0xf0] sm:$0xf]
        %v1239 = vld [vmem:[%s459 + $0xf4] sm:$0xf]
        %v1240 = vld [vmem:[%s459 + $0xf8] sm:$0xf]
        %v1241 = vld [vmem:[%s459 + $0xfc] sm:$0xf]
        %v1242 = vld [vmem:[%s459 + $0x100] sm:$0xf]
        %v1243 = vld [vmem:[%s459 + $0x104] sm:$0xf]
        %v1244 = vld [vmem:[%s459 + $0x108] sm:$0xf]
        %v1245 = vld [vmem:[%s459 + $0x10c] sm:$0xf]
        %v1246 = vld [vmem:[%s459 + $0x110] sm:$0xf]
        %v1247 = vld [vmem:[%s459 + $0x114] sm:$0xf]
        %v1248 = vld [vmem:[%s459 + $0x118] sm:$0xf]
        %v1249 = vld [vmem:[%s459 + $0x11c] sm:$0xf]
        %v1250 = vld [vmem:[%s459 + $0x120] sm:$0xf]
        %v1251 = vld [vmem:[%s459 + $0x124] sm:$0xf]
        %v1252 = vld [vmem:[%s459 + $0x128] sm:$0xf]
        %v1253 = vld [vmem:[%s459 + $0x12c] sm:$0xf]
        %v1254 = vld [vmem:[%s459 + $0x130] sm:$0xf]
        %v1255 = vld [vmem:[%s459 + $0x134] sm:$0xf]
        %v1256 = vld [vmem:[%s459 + $0x138] sm:$0xf]
        %v1257 = vld [vmem:[%s459 + $0x13c] sm:$0xf]
        %v1258 = vld [vmem:[%s459 + $0x140] sm:$0xf]
        %v1259 = vld [vmem:[%s459 + $0x144] sm:$0xf]
        %v1260 = vld [vmem:[%s459 + $0x148] sm:$0xf]
        %v1261 = vld [vmem:[%s459 + $0x14c] sm:$0xf]
        %v1262 = vld [vmem:[%s459 + $0x150] sm:$0xf]
        %v1263 = vld [vmem:[%s459 + $0x154] sm:$0xf]
        %v1264 = vld [vmem:[%s459 + $0x158] sm:$0xf]
        %v1265 = vld [vmem:[%s459 + $0x15c] sm:$0xf]
        %v1266 = vld [vmem:[%s459 + $0x160] sm:$0xf]
        %v1267 = vld [vmem:[%s459 + $0x164] sm:$0xf]
        %v1268 = vld [vmem:[%s459 + $0x168] sm:$0xf]
        %v1269 = vld [vmem:[%s459 + $0x16c] sm:$0xf]
        %v1270 = vld [vmem:[%s459 + $0x170] sm:$0xf]
        %v1271 = vld [vmem:[%s459 + $0x174] sm:$0xf]
        %v1272 = vld [vmem:[%s459 + $0x178] sm:$0xf]
        %v1273 = vld [vmem:[%s459 + $0x17c] sm:$0xf]
        %v1274 = vld [vmem:[%s459 + $0x180] sm:$0xf]
        %v1275 = vld [vmem:[%s459 + $0x184] sm:$0xf]
        %v1276 = vld [vmem:[%s459 + $0x188] sm:$0xf]
        %v1277 = vld [vmem:[%s459 + $0x18c] sm:$0xf]
        %v1278 = vld [vmem:[%s459 + $0x190] sm:$0xf]
        %v1279 = vld [vmem:[%s459 + $0x194] sm:$0xf]
        %v1280 = vld [vmem:[%s459 + $0x198] sm:$0xf]
        %v1281 = vld [vmem:[%s459 + $0x19c] sm:$0xf]
        %v1282 = vld [vmem:[%s459 + $0x1a0] sm:$0xf]
        %v1283 = vld [vmem:[%s459 + $0x1a4] sm:$0xf]
        %v1284 = vld [vmem:[%s459 + $0x1a8] sm:$0xf]
        %v1285 = vld [vmem:[%s459 + $0x1ac] sm:$0xf]
        %v1286 = vld [vmem:[%s459 + $0x1b0] sm:$0xf]
        %v1287 = vld [vmem:[%s459 + $0x1b4] sm:$0xf]
        %v1288 = vld [vmem:[%s459 + $0x1b8] sm:$0xf]
        %v1289 = vld [vmem:[%s459 + $0x1bc] sm:$0xf]
        %v1290 = vld [vmem:[%s459 + $0x1c0] sm:$0xf]
        %v1291 = vld [vmem:[%s459 + $0x1c4] sm:$0xf]
        %v1292 = vld [vmem:[%s459 + $0x1c8] sm:$0xf]
        %v1293 = vld [vmem:[%s459 + $0x1cc] sm:$0xf]
        %v1294 = vld [vmem:[%s459 + $0x1d0] sm:$0xf]
        %v1295 = vld [vmem:[%s459 + $0x1d4] sm:$0xf]
        %v1296 = vld [vmem:[%s459 + $0x1d8] sm:$0xf]
        %v1297 = vld [vmem:[%s459 + $0x1dc] sm:$0xf]
        %v1298 = vld [vmem:[%s459 + $0x1e0] sm:$0xf]
        %v1299 = vld [vmem:[%s459 + $0x1e4] sm:$0xf]
        %v1300 = vld [vmem:[%s459 + $0x1e8] sm:$0xf]
        %v1301 = vld [vmem:[%s459 + $0x1ec] sm:$0xf]
        %v1302 = vld [vmem:[%s459 + $0x1f0] sm:$0xf]
        %v1303 = vld [vmem:[%s459 + $0x1f4] sm:$0xf]
        %v1304 = vld [vmem:[%s459 + $0x1f8] sm:$0xf]
        %v1305 = vld [vmem:[%s459 + $0x1fc] sm:$0xf]
        %v1306 = vld [vmem:[%s522] sm:$0x1]
        %v1308 = vperm.slane %v1306, 0
        %v1438 = vunpack.c.l.b16 %v1178
        %v1439 = vunpack.c.l.b16 %v1179
        %v1440 = vunpack.c.l.b16 %v1180
        %v1441 = vunpack.c.l.b16 %v1181
        %v1442 = vunpack.c.l.b16 %v1182
        %v1443 = vunpack.c.l.b16 %v1183
        %v1444 = vunpack.c.l.b16 %v1184
        %v1445 = vunpack.c.l.b16 %v1185
        %v1446 = vunpack.c.l.b16 %v1186
        %v1447 = vunpack.c.l.b16 %v1187
        %v1448 = vunpack.c.l.b16 %v1188
        %v1449 = vunpack.c.l.b16 %v1189
        %v1450 = vunpack.c.l.b16 %v1190
        %v1451 = vunpack.c.l.b16 %v1191
        %v1452 = vunpack.c.l.b16 %v1192
        %v1453 = vunpack.c.l.b16 %v1193
        %v1454 = vunpack.c.l.b16 %v1194
        %v1455 = vunpack.c.l.b16 %v1195
        %v1456 = vunpack.c.l.b16 %v1196
        %v1457 = vunpack.c.l.b16 %v1197
        %v1458 = vunpack.c.l.b16 %v1198
        %v1459 = vunpack.c.l.b16 %v1199
        %v1460 = vunpack.c.l.b16 %v1200
        %v1461 = vunpack.c.l.b16 %v1201
        %v1462 = vunpack.c.l.b16 %v1202
        %v1463 = vunpack.c.l.b16 %v1203
        %v1464 = vunpack.c.l.b16 %v1204
        %v1465 = vunpack.c.l.b16 %v1205
        %v1466 = vunpack.c.l.b16 %v1206
        %v1467 = vunpack.c.l.b16 %v1207
        %v1468 = vunpack.c.l.b16 %v1208
        %v1469 = vunpack.c.l.b16 %v1209
        %v1470 = vunpack.c.l.b16 %v1210
        %v1471 = vunpack.c.l.b16 %v1211
        %v1472 = vunpack.c.l.b16 %v1212
        %v1473 = vunpack.c.l.b16 %v1213
        %v1474 = vunpack.c.l.b16 %v1214
        %v1475 = vunpack.c.l.b16 %v1215
        %v1476 = vunpack.c.l.b16 %v1216
        %v1477 = vunpack.c.l.b16 %v1217
        %v1478 = vunpack.c.l.b16 %v1218
        %v1479 = vunpack.c.l.b16 %v1219
        %v1480 = vunpack.c.l.b16 %v1220
        %v1481 = vunpack.c.l.b16 %v1221
        %v1482 = vunpack.c.l.b16 %v1222
        %v1483 = vunpack.c.l.b16 %v1223
        %v1484 = vunpack.c.l.b16 %v1224
        %v1485 = vunpack.c.l.b16 %v1225
        %v1486 = vunpack.c.l.b16 %v1226
        %v1487 = vunpack.c.l.b16 %v1227
        %v1488 = vunpack.c.l.b16 %v1228
        %v1489 = vunpack.c.l.b16 %v1229
        %v1490 = vunpack.c.l.b16 %v1230
        %v1491 = vunpack.c.l.b16 %v1231
        %v1492 = vunpack.c.l.b16 %v1232
        %v1493 = vunpack.c.l.b16 %v1233
        %v1494 = vunpack.c.l.b16 %v1234
        %v1495 = vunpack.c.l.b16 %v1235
        %v1496 = vunpack.c.l.b16 %v1236
        %v1497 = vunpack.c.l.b16 %v1237
        %v1498 = vunpack.c.l.b16 %v1238
        %v1499 = vunpack.c.l.b16 %v1239
        %v1500 = vunpack.c.l.b16 %v1240
        %v1501 = vunpack.c.l.b16 %v1241
        %v1502 = vunpack.c.l.b16 %v1242
        %v1503 = vunpack.c.l.b16 %v1243
        %v1504 = vunpack.c.l.b16 %v1244
        %v1505 = vunpack.c.l.b16 %v1245
        %v1506 = vunpack.c.l.b16 %v1246
        %v1507 = vunpack.c.l.b16 %v1247
        %v1508 = vunpack.c.l.b16 %v1248
        %v1509 = vunpack.c.l.b16 %v1249
        %v1510 = vunpack.c.l.b16 %v1250
        %v1511 = vunpack.c.l.b16 %v1251
        %v1512 = vunpack.c.l.b16 %v1252
        %v1513 = vunpack.c.l.b16 %v1253
        %v1514 = vunpack.c.l.b16 %v1254
        %v1515 = vunpack.c.l.b16 %v1255
        %v1516 = vunpack.c.l.b16 %v1256
        %v1517 = vunpack.c.l.b16 %v1257
        %v1518 = vunpack.c.l.b16 %v1258
        %v1519 = vunpack.c.l.b16 %v1259
        %v1520 = vunpack.c.l.b16 %v1260
        %v1521 = vunpack.c.l.b16 %v1261
        %v1522 = vunpack.c.l.b16 %v1262
        %v1523 = vunpack.c.l.b16 %v1263
        %v1524 = vunpack.c.l.b16 %v1264
        %v1525 = vunpack.c.l.b16 %v1265
        %v1526 = vunpack.c.l.b16 %v1266
        %v1527 = vunpack.c.l.b16 %v1267
        %v1528 = vunpack.c.l.b16 %v1268
        %v1529 = vunpack.c.l.b16 %v1269
        %v1530 = vunpack.c.l.b16 %v1270
        %v1531 = vunpack.c.l.b16 %v1271
        %v1532 = vunpack.c.l.b16 %v1272
        %v1533 = vunpack.c.l.b16 %v1273
        %v1534 = vunpack.c.l.b16 %v1274
        %v1535 = vunpack.c.l.b16 %v1275
        %v1536 = vunpack.c.l.b16 %v1276
        %v1537 = vunpack.c.l.b16 %v1277
        %v1538 = vunpack.c.l.b16 %v1278
        %v1539 = vunpack.c.l.b16 %v1279
        %v1540 = vunpack.c.l.b16 %v1280
        %v1541 = vunpack.c.l.b16 %v1281
        %v1542 = vunpack.c.l.b16 %v1282
        %v1543 = vunpack.c.l.b16 %v1283
        %v1544 = vunpack.c.l.b16 %v1284
        %v1545 = vunpack.c.l.b16 %v1285
        %v1546 = vunpack.c.l.b16 %v1286
        %v1547 = vunpack.c.l.b16 %v1287
        %v1548 = vunpack.c.l.b16 %v1288
        %v1549 = vunpack.c.l.b16 %v1289
        %v1550 = vunpack.c.l.b16 %v1290
        %v1551 = vunpack.c.l.b16 %v1291
        %v1552 = vunpack.c.l.b16 %v1292
        %v1553 = vunpack.c.l.b16 %v1293
        %v1554 = vunpack.c.l.b16 %v1294
        %v1555 = vunpack.c.l.b16 %v1295
        %v1556 = vunpack.c.l.b16 %v1296
        %v1557 = vunpack.c.l.b16 %v1297
        %v1558 = vunpack.c.l.b16 %v1298
        %v1559 = vunpack.c.l.b16 %v1299
        %v1560 = vunpack.c.l.b16 %v1300
        %v1561 = vunpack.c.l.b16 %v1301
        %v1562 = vunpack.c.l.b16 %v1302
        %v1563 = vunpack.c.l.b16 %v1303
        %v1564 = vunpack.c.l.b16 %v1304
        %v1565 = vunpack.c.l.b16 %v1305
        %v1566 = vpack.c.b16 %v1439, %v1438
        %v1567 = vpack.c.b16 %v1441, %v1440
        %v1568 = vpack.c.b16 %v1443, %v1442
        %v1569 = vpack.c.b16 %v1445, %v1444
        %v1570 = vpack.c.b16 %v1447, %v1446
        %v1571 = vpack.c.b16 %v1449, %v1448
        %v1572 = vpack.c.b16 %v1451, %v1450
        %v1573 = vpack.c.b16 %v1453, %v1452
        %v1574 = vpack.c.b16 %v1455, %v1454
        %v1575 = vpack.c.b16 %v1457, %v1456
        %v1576 = vpack.c.b16 %v1459, %v1458
        %v1577 = vpack.c.b16 %v1461, %v1460
        %v1578 = vpack.c.b16 %v1463, %v1462
        %v1579 = vpack.c.b16 %v1465, %v1464
        %v1580 = vpack.c.b16 %v1467, %v1466
        %v1581 = vpack.c.b16 %v1469, %v1468
        %v1582 = vpack.c.b16 %v1471, %v1470
        %v1583 = vpack.c.b16 %v1473, %v1472
        %v1584 = vpack.c.b16 %v1475, %v1474
        %v1585 = vpack.c.b16 %v1477, %v1476
        %v1586 = vpack.c.b16 %v1479, %v1478
        %v1587 = vpack.c.b16 %v1481, %v1480
        %v1588 = vpack.c.b16 %v1483, %v1482
        %v1589 = vpack.c.b16 %v1485, %v1484
        %v1590 = vpack.c.b16 %v1487, %v1486
        %v1591 = vpack.c.b16 %v1489, %v1488
        %v1592 = vpack.c.b16 %v1491, %v1490
        %v1593 = vpack.c.b16 %v1493, %v1492
        %v1594 = vpack.c.b16 %v1495, %v1494
        %v1595 = vpack.c.b16 %v1497, %v1496
        %v1596 = vpack.c.b16 %v1499, %v1498
        %v1597 = vpack.c.b16 %v1501, %v1500
        %v1598 = vpack.c.b16 %v1503, %v1502
        %v1599 = vpack.c.b16 %v1505, %v1504
        %v1600 = vpack.c.b16 %v1507, %v1506
        %v1601 = vpack.c.b16 %v1509, %v1508
        %v1602 = vpack.c.b16 %v1511, %v1510
        %v1603 = vpack.c.b16 %v1513, %v1512
        %v1604 = vpack.c.b16 %v1515, %v1514
        %v1605 = vpack.c.b16 %v1517, %v1516
        %v1606 = vpack.c.b16 %v1519, %v1518
        %v1607 = vpack.c.b16 %v1521, %v1520
        %v1608 = vpack.c.b16 %v1523, %v1522
        %v1609 = vpack.c.b16 %v1525, %v1524
        %v1610 = vpack.c.b16 %v1527, %v1526
        %v1611 = vpack.c.b16 %v1529, %v1528
        %v1612 = vpack.c.b16 %v1531, %v1530
        %v1613 = vpack.c.b16 %v1533, %v1532
        %v1614 = vpack.c.b16 %v1535, %v1534
        %v1615 = vpack.c.b16 %v1537, %v1536
        %v1616 = vpack.c.b16 %v1539, %v1538
        %v1617 = vpack.c.b16 %v1541, %v1540
        %v1618 = vpack.c.b16 %v1543, %v1542
        %v1619 = vpack.c.b16 %v1545, %v1544
        %v1620 = vpack.c.b16 %v1547, %v1546
        %v1621 = vpack.c.b16 %v1549, %v1548
        %v1622 = vpack.c.b16 %v1551, %v1550
        %v1623 = vpack.c.b16 %v1553, %v1552
        %v1624 = vpack.c.b16 %v1555, %v1554
        %v1625 = vpack.c.b16 %v1557, %v1556
        %v1626 = vpack.c.b16 %v1559, %v1558
        %v1627 = vpack.c.b16 %v1561, %v1560
        %v1628 = vpack.c.b16 %v1563, %v1562
        %v1629 = vpack.c.b16 %v1565, %v1564
        %1694 = vmatpush.bf16.msra.mxu0 %v1573
        %1695 = vmatpush.bf16.msra.mxu0 %v1572
        %1696 = vmatpush.bf16.msra.mxu0 %v1571
        %1697 = vmatpush.bf16.msra.mxu0 %v1570
        %1698 = vmatpush.bf16.msra.mxu0 %v1569
        %1699 = vmatpush.bf16.msra.mxu0 %v1568
        %1700 = vmatpush.bf16.msra.mxu0 %v1567
        %1701 = vmatpush.bf16.msra.mxu0 %v1566
        %1702 = vmatmul.bf16.gmra.mxu0 %v547
        %v1703 = vpop.f32.mrf.mxu0
        %v1704 = vadd.f32 %v1308, %v1703
        %v1705 = vpop.f32.mrf.mxu0
        %1706 = vdwg.mxu0
        %1707 = vmatpush.bf16.msra.mxu0 %v1581
        %1708 = vmatpush.bf16.msra.mxu0 %v1580
        %1709 = vmatpush.bf16.msra.mxu0 %v1579
        %1710 = vmatpush.bf16.msra.mxu0 %v1578
        %1711 = vmatpush.bf16.msra.mxu0 %v1577
        %1712 = vmatpush.bf16.msra.mxu0 %v1576
        %1713 = vmatpush.bf16.msra.mxu0 %v1575
        %1714 = vmatpush.bf16.msra.mxu0 %v1574
        %1715 = vmatmul.bf16.gmra.mxu0 %v548
        %v1716 = vpop.f32.mrf.mxu0
        %v1717 = vadd.f32 %v1704, %v1716
        %v1718 = vpop.f32.mrf.mxu0
        %1719 = vdwg.mxu0
        %1720 = vmatpush.bf16.msra.mxu0 %v1589
        %1721 = vmatpush.bf16.msra.mxu0 %v1588
        %1722 = vmatpush.bf16.msra.mxu0 %v1587
        %1723 = vmatpush.bf16.msra.mxu0 %v1586
        %1724 = vmatpush.bf16.msra.mxu0 %v1585
        %1725 = vmatpush.bf16.msra.mxu0 %v1584
        %1726 = vmatpush.bf16.msra.mxu0 %v1583
        %1727 = vmatpush.bf16.msra.mxu0 %v1582
        %1728 = vmatmul.bf16.gmra.mxu0 %v549
        %v1729 = vpop.f32.mrf.mxu0
        %v1730 = vadd.f32 %v1717, %v1729
        %v1731 = vpop.f32.mrf.mxu0
        %1732 = vdwg.mxu0
        %1733 = vmatpush.bf16.msra.mxu0 %v1597
        %1734 = vmatpush.bf16.msra.mxu0 %v1596
        %1735 = vmatpush.bf16.msra.mxu0 %v1595
        %1736 = vmatpush.bf16.msra.mxu0 %v1594
        %1737 = vmatpush.bf16.msra.mxu0 %v1593
        %1738 = vmatpush.bf16.msra.mxu0 %v1592
        %1739 = vmatpush.bf16.msra.mxu0 %v1591
        %1740 = vmatpush.bf16.msra.mxu0 %v1590
        %1741 = vmatmul.bf16.gmra.mxu0 %v550
        %v1742 = vpop.f32.mrf.mxu0
        %v1743 = vadd.f32 %v1730, %v1742
        %v1744 = vpop.f32.mrf.mxu0
        %1745 = vdwg.mxu0
        %1746 = vmatpush.bf16.msra.mxu0 %v1605
        %1747 = vmatpush.bf16.msra.mxu0 %v1604
        %1748 = vmatpush.bf16.msra.mxu0 %v1603
        %1749 = vmatpush.bf16.msra.mxu0 %v1602
        %1750 = vmatpush.bf16.msra.mxu0 %v1601
        %1751 = vmatpush.bf16.msra.mxu0 %v1600
        %1752 = vmatpush.bf16.msra.mxu0 %v1599
        %1753 = vmatpush.bf16.msra.mxu0 %v1598
        %1754 = vmatmul.bf16.gmra.mxu0 %v551
        %v1755 = vpop.f32.mrf.mxu0
        %v1756 = vadd.f32 %v1743, %v1755
        %v1757 = vpop.f32.mrf.mxu0
        %1758 = vdwg.mxu0
        %1759 = vmatpush.bf16.msra.mxu0 %v1613
        %1760 = vmatpush.bf16.msra.mxu0 %v1612
        %1761 = vmatpush.bf16.msra.mxu0 %v1611
        %1762 = vmatpush.bf16.msra.mxu0 %v1610
        %1763 = vmatpush.bf16.msra.mxu0 %v1609
        %1764 = vmatpush.bf16.msra.mxu0 %v1608
        %1765 = vmatpush.bf16.msra.mxu0 %v1607
        %1766 = vmatpush.bf16.msra.mxu0 %v1606
        %1767 = vmatmul.bf16.gmra.mxu0 %v552
        %v1768 = vpop.f32.mrf.mxu0
        %v1769 = vadd.f32 %v1756, %v1768
        %v1770 = vpop.f32.mrf.mxu0
        %1771 = vdwg.mxu0
        %1772 = vmatpush.bf16.msra.mxu0 %v1621
        %1773 = vmatpush.bf16.msra.mxu0 %v1620
        %1774 = vmatpush.bf16.msra.mxu0 %v1619
        %1775 = vmatpush.bf16.msra.mxu0 %v1618
        %1776 = vmatpush.bf16.msra.mxu0 %v1617
        %1777 = vmatpush.bf16.msra.mxu0 %v1616
        %1778 = vmatpush.bf16.msra.mxu0 %v1615
        %1779 = vmatpush.bf16.msra.mxu0 %v1614
        %1780 = vmatmul.bf16.gmra.mxu0 %v553
        %v1781 = vpop.f32.mrf.mxu0
        %v1782 = vadd.f32 %v1769, %v1781
        %v1783 = vpop.f32.mrf.mxu0
        %1784 = vdwg.mxu0
        %1785 = vmatpush.bf16.msra.mxu0 %v1629
        %1786 = vmatpush.bf16.msra.mxu0 %v1628
        %1787 = vmatpush.bf16.msra.mxu0 %v1627
        %1788 = vmatpush.bf16.msra.mxu0 %v1626
        %1789 = vmatpush.bf16.msra.mxu0 %v1625
        %1790 = vmatpush.bf16.msra.mxu0 %v1624
        %1791 = vmatpush.bf16.msra.mxu0 %v1623
        %1792 = vmatpush.bf16.msra.mxu0 %v1622
        %1793 = vmatmul.bf16.gmra.mxu0 %v554
        %v1794 = vpop.f32.mrf.mxu0
        %v1795 = vadd.f32 %v1782, %v1794
        %v1796 = vpop.f32.mrf.mxu0
        %1797 = vdwg.mxu0
        %s1798 = scalar_lea.vmem [#allocation3], %s1175
        %1799 = vst [vmem:[%s1798] sm:$0xff] %v1795
        %p1800 = scmp.eq.s32.totalorder %s31, 2
        // Predicated region
        $region85: #{tpu_custom_call.1} parent=67 // pred_check
          %p1801 = pneg %p1800
        $region86: #{tpu_custom_call.1} parent=67 // pred_check_branch
          %1803 = sbr.rel (%p1801) target = $region88
        $region87: #{tpu_custom_call.1} parent=67 // pred_region
          %v1804 = vld [vmem:[#allocation2] sm:$0xff]
          %s1805 = scalar_lea.vmem [#allocation2], 8
          %v1806 = vld [vmem:[%s1805] sm:$0xff]
          %s1807 = scalar_lea.vmem [#allocation2], 16
          %v1808 = vld [vmem:[%s1807] sm:$0xff]
          %v1809 = vld [vmem:[#allocation3] sm:$0xff]
          %s1810 = scalar_lea.vmem [#allocation3], 8
          %v1811 = vld [vmem:[%s1810] sm:$0xff]
          %s1812 = scalar_lea.vmem [#allocation3], 16
          %v1813 = vld [vmem:[%s1812] sm:$0xff]
          %1814 = vmatpush.xpose.msra.mxu0 0.0
          %1815 = vmatpush.xpose.msra.mxu0 0.0
          %1816 = vmatpush.xpose.msra.mxu0 0.0
          %1817 = vmatpush.xpose.msra.mxu0 0.0
          %1818 = vmatpush.xpose.msra.mxu0 0.0
          %1819 = vmatpush.xpose.msra.mxu0 0.0
          %1820 = vmatpush.xpose.msra.mxu0 0.0
          %1821 = vmatpush.xpose.msra.mxu0 0.0
          %1822 = vmatpush.xpose.msra.mxu0 0.0
          %1823 = vmatpush.xpose.msra.mxu0 0.0
          %1824 = vmatpush.xpose.msra.mxu0 0.0
          %1825 = vmatpush.xpose.msra.mxu0 0.0
          %1826 = vmatpush.xpose.msra.mxu0 0.0
          %1827 = vmatpush.xpose.msra.mxu0 0.0
          %1828 = vmatpush.xpose.msra.mxu0 0.0
          %1829 = vmatpush.xpose.msra.mxu0 %v1806
          %1830 = vmatmul.f32.gmra.mxu0 %v1809
          %v1831 = vpop.f32.mrf.mxu0
          %v1832 = vadd.f32 0.0, %v1831
          %1833 = vdwg.mxu0
          %v1834 = vmul.f32 %v1832, 0.088388346
          %vm1835 = vcmask 64512
          %v1836 = vsel %vm1835, %v1834, -inf
          %1837 = vmax.xlane.f32.xlu0 %v1836
          %v1838 = vpop.xlane.xlu0 %1837
          %v1839 = vsub.f32 %v1834, %v1838
          %v1840 = vmul.f32 %v1839, 1.442695
          %v1841 = vpow.pop %v1840
          %v1842 = vsel %vm1835, %v1841, 0.0
          %1843 = vadd.xlane.f32.xlu0 %v1842
          %v1844 = vpop.xlane.xlu0 %1843
          %v1845 = vrcp.pop %v1844
          %v1846 = vmul.f32 %v1844, %v1845
          %v1847 = vsub.f32 1.0, %v1846
          %v1848 = vmul.f32 %v1845, %v1847
          %v1849 = vadd.f32 %v1845, %v1848
          %vm1850 = vweird.f32 %v1844
          %vm1851 = vweird.f32 %v1845
          %vm1852 = vmor %vm1850, %vm1851
          %v1853 = vsel %vm1852, %v1845, %v1849
          %v1854 = vand.u32 2147483647, %v1844
          %vm1855 = vcmp.eq.f32.partialorder %v1854, 8.507059e+37
          %v1856 = vand.u32 %v1844, 2147483648
          %v1857 = vor.u32 1.1754944e-38, %v1856
          %v1858 = vsel %vm1855, %v1857, %v1853
          %v1859 = vmul.f32 %v1841, %v1858
          %v1861 = vsel %vm1835, %v1859, 0
          %1863 = vmatpush.msra.mxu0 0.0
          %1864 = vmatpush.msra.mxu0 0.0
          %1865 = vmatpush.msra.mxu0 0.0
          %1866 = vmatpush.msra.mxu0 0.0
          %1867 = vmatpush.msra.mxu0 0.0
          %1868 = vmatpush.msra.mxu0 0.0
          %1869 = vmatpush.msra.mxu0 0.0
          %1870 = vmatpush.msra.mxu0 0.0
          %1871 = vmatpush.msra.mxu0 0.0
          %1872 = vmatpush.msra.mxu0 0.0
          %1873 = vmatpush.msra.mxu0 0.0
          %1874 = vmatpush.msra.mxu0 0.0
          %1875 = vmatpush.msra.mxu0 0.0
          %1876 = vmatpush.msra.mxu0 0.0
          %1877 = vmatpush.msra.mxu0 0.0
          %1878 = vmatpush.msra.mxu0 %v1808
          %1879 = vmatmul.f32.gmra.mxu0 %v1861
          %v1880 = vpop.f32.mrf.mxu0
          %v1881 = vadd.f32 0.0, %v1880
          %1882 = vdwg.mxu0
          %1883 = vmatpush.xpose.msra.mxu0 0.0
          %1884 = vmatpush.xpose.msra.mxu0 0.0
          %1885 = vmatpush.xpose.msra.mxu0 0.0
          %1886 = vmatpush.xpose.msra.mxu0 0.0
          %1887 = vmatpush.xpose.msra.mxu0 0.0
          %1888 = vmatpush.xpose.msra.mxu0 0.0
          %1889 = vmatpush.xpose.msra.mxu0 0.0
          %1890 = vmatpush.xpose.msra.mxu0 0.0
          %1891 = vmatpush.xpose.msra.mxu0 0.0
          %1892 = vmatpush.xpose.msra.mxu0 0.0
          %1893 = vmatpush.xpose.msra.mxu0 0.0
          %1894 = vmatpush.xpose.msra.mxu0 0.0
          %1895 = vmatpush.xpose.msra.mxu0 0.0
          %1896 = vmatpush.xpose.msra.mxu0 0.0
          %1897 = vmatpush.xpose.msra.mxu0 0.0
          %1898 = vmatpush.xpose.msra.mxu0 %v1811
          %1899 = vmatmul.f32.gmra.mxu0 %v1804
          %v1900 = vpop.f32.mrf.mxu0
          %v1901 = vadd.f32 0.0, %v1900
          %1902 = vdwg.mxu0
          %v1903 = vmul.f32 %v1901, 0.088388346
          %v1904 = vsel %vm1835, %v1903, -inf
          %1905 = vmax.xlane.f32.xlu0 %v1904
          %v1906 = vpop.xlane.xlu0 %1905
          %v1907 = vsub.f32 %v1903, %v1906
          %v1908 = vmul.f32 %v1907, 1.442695
          %v1909 = vpow.pop %v1908
          %v1910 = vsel %vm1835, %v1909, 0.0
          %1911 = vadd.xlane.f32.xlu0 %v1910
          %v1912 = vpop.xlane.xlu0 %1911
          %v1913 = vrcp.pop %v1912
          %v1914 = vmul.f32 %v1912, %v1913
          %v1915 = vsub.f32 1.0, %v1914
          %v1916 = vmul.f32 %v1913, %v1915
          %v1917 = vadd.f32 %v1913, %v1916
          %vm1918 = vweird.f32 %v1912
          %vm1919 = vweird.f32 %v1913
          %vm1920 = vmor %vm1918, %vm1919
          %v1921 = vsel %vm1920, %v1913, %v1917
          %v1922 = vand.u32 2147483647, %v1912
          %vm1923 = vcmp.eq.f32.partialorder %v1922, 8.507059e+37
          %v1924 = vand.u32 %v1912, 2147483648
          %v1925 = vor.u32 1.1754944e-38, %v1924
          %v1926 = vsel %vm1923, %v1925, %v1921
          %v1927 = vmul.f32 %v1909, %v1926
          %v1929 = vsel %vm1835, %v1927, 0
          %1931 = vmatpush.msra.mxu0 0.0
          %1932 = vmatpush.msra.mxu0 0.0
          %1933 = vmatpush.msra.mxu0 0.0
          %1934 = vmatpush.msra.mxu0 0.0
          %1935 = vmatpush.msra.mxu0 0.0
          %1936 = vmatpush.msra.mxu0 0.0
          %1937 = vmatpush.msra.mxu0 0.0
          %1938 = vmatpush.msra.mxu0 0.0
          %1939 = vmatpush.msra.mxu0 0.0
          %1940 = vmatpush.msra.mxu0 0.0
          %1941 = vmatpush.msra.mxu0 0.0
          %1942 = vmatpush.msra.mxu0 0.0
          %1943 = vmatpush.msra.mxu0 0.0
          %1944 = vmatpush.msra.mxu0 0.0
          %1945 = vmatpush.msra.mxu0 0.0
          %1946 = vmatpush.msra.mxu0 %v1813
          %1947 = vmatmul.f32.gmra.mxu0 %v1929
          %v1948 = vpop.f32.mrf.mxu0
          %v1949 = vadd.f32 0.0, %v1948
          %1950 = vdwg.mxu0
          %v1951 = vld [vmem:[#allocation9] sm:$0xff]
          %v1952 = vld [vmem:[#allocation9 + $0x8] sm:$0xff]
          %v1953 = vld [vmem:[#allocation9 + $0x10] sm:$0xff]
          %v1954 = vld [vmem:[#allocation9 + $0x18] sm:$0xff]
          %v1955 = vld [vmem:[#allocation9 + $0x20] sm:$0xff]
          %v1956 = vld [vmem:[#allocation9 + $0x28] sm:$0xff]
          %v1957 = vld [vmem:[#allocation9 + $0x30] sm:$0xff]
          %v1958 = vld [vmem:[#allocation9 + $0x38] sm:$0xff]
          %v1959 = vld [vmem:[#allocation9 + $0x40] sm:$0xff]
          %v1960 = vld [vmem:[#allocation9 + $0x48] sm:$0xff]
          %v1961 = vld [vmem:[#allocation9 + $0x50] sm:$0xff]
          %v1962 = vld [vmem:[#allocation9 + $0x58] sm:$0xff]
          %v1963 = vld [vmem:[#allocation9 + $0x60] sm:$0xff]
          %v1964 = vld [vmem:[#allocation9 + $0x68] sm:$0xff]
          %v1965 = vld [vmem:[#allocation9 + $0x70] sm:$0xff]
          %v1966 = vld [vmem:[#allocation9 + $0x78] sm:$0xff]
          %v1967 = vld [vmem:[#allocation9 + $0x80] sm:$0xff]
          %v1968 = vld [vmem:[#allocation9 + $0x88] sm:$0xff]
          %v1969 = vld [vmem:[#allocation9 + $0x90] sm:$0xff]
          %v1970 = vld [vmem:[#allocation9 + $0x98] sm:$0xff]
          %v1971 = vld [vmem:[#allocation9 + $0xa0] sm:$0xff]
          %v1972 = vld [vmem:[#allocation9 + $0xa8] sm:$0xff]
          %v1973 = vld [vmem:[#allocation9 + $0xb0] sm:$0xff]
          %v1974 = vld [vmem:[#allocation9 + $0xb8] sm:$0xff]
          %v1975 = vld [vmem:[#allocation9 + $0xc0] sm:$0xff]
          %v1976 = vld [vmem:[#allocation9 + $0xc8] sm:$0xff]
          %v1977 = vld [vmem:[#allocation9 + $0xd0] sm:$0xff]
          %v1978 = vld [vmem:[#allocation9 + $0xd8] sm:$0xff]
          %v1979 = vld [vmem:[#allocation9 + $0xe0] sm:$0xff]
          %v1980 = vld [vmem:[#allocation9 + $0xe8] sm:$0xff]
          %v1981 = vld [vmem:[#allocation9 + $0xf0] sm:$0xff]
          %v1982 = vld [vmem:[#allocation9 + $0xf8] sm:$0xff]
          %v1983 = vld [vmem:[#allocation9 + $0x100] sm:$0xff]
          %v1984 = vld [vmem:[#allocation9 + $0x108] sm:$0xff]
          %v1985 = vld [vmem:[#allocation9 + $0x110] sm:$0xff]
          %v1986 = vld [vmem:[#allocation9 + $0x118] sm:$0xff]
          %v1987 = vld [vmem:[#allocation9 + $0x120] sm:$0xff]
          %v1988 = vld [vmem:[#allocation9 + $0x128] sm:$0xff]
          %v1989 = vld [vmem:[#allocation9 + $0x130] sm:$0xff]
          %v1990 = vld [vmem:[#allocation9 + $0x138] sm:$0xff]
          %v1991 = vld [vmem:[#allocation9 + $0x140] sm:$0xff]
          %v1992 = vld [vmem:[#allocation9 + $0x148] sm:$0xff]
          %v1993 = vld [vmem:[#allocation9 + $0x150] sm:$0xff]
          %v1994 = vld [vmem:[#allocation9 + $0x158] sm:$0xff]
          %v1995 = vld [vmem:[#allocation9 + $0x160] sm:$0xff]
          %v1996 = vld [vmem:[#allocation9 + $0x168] sm:$0xff]
          %v1997 = vld [vmem:[#allocation9 + $0x170] sm:$0xff]
          %v1998 = vld [vmem:[#allocation9 + $0x178] sm:$0xff]
          %v1999 = vld [vmem:[#allocation9 + $0x180] sm:$0xff]
          %v2000 = vld [vmem:[#allocation9 + $0x188] sm:$0xff]
          %v2001 = vld [vmem:[#allocation9 + $0x190] sm:$0xff]
          %v2002 = vld [vmem:[#allocation9 + $0x198] sm:$0xff]
          %v2003 = vld [vmem:[#allocation9 + $0x1a0] sm:$0xff]
          %v2004 = vld [vmem:[#allocation9 + $0x1a8] sm:$0xff]
          %v2005 = vld [vmem:[#allocation9 + $0x1b0] sm:$0xff]
          %v2006 = vld [vmem:[#allocation9 + $0x1b8] sm:$0xff]
          %v2007 = vld [vmem:[#allocation9 + $0x1c0] sm:$0xff]
          %v2008 = vld [vmem:[#allocation9 + $0x1c8] sm:$0xff]
          %v2009 = vld [vmem:[#allocation9 + $0x1d0] sm:$0xff]
          %v2010 = vld [vmem:[#allocation9 + $0x1d8] sm:$0xff]
          %v2011 = vld [vmem:[#allocation9 + $0x1e0] sm:$0xff]
          %v2012 = vld [vmem:[#allocation9 + $0x1e8] sm:$0xff]
          %v2013 = vld [vmem:[#allocation9 + $0x1f0] sm:$0xff]
          %v2014 = vld [vmem:[#allocation9 + $0x1f8] sm:$0xff]
          %2015 = vmatpush.msra.mxu0 %v2013
          %2016 = vmatpush.msra.mxu0 %v2011
          %2017 = vmatpush.msra.mxu0 %v2009
          %2018 = vmatpush.msra.mxu0 %v2007
          %2019 = vmatpush.msra.mxu0 %v2005
          %2020 = vmatpush.msra.mxu0 %v2003
          %2021 = vmatpush.msra.mxu0 %v2001
          %2022 = vmatpush.msra.mxu0 %v1999
          %2023 = vmatpush.msra.mxu0 %v1997
          %2024 = vmatpush.msra.mxu0 %v1995
          %2025 = vmatpush.msra.mxu0 %v1993
          %2026 = vmatpush.msra.mxu0 %v1991
          %2027 = vmatpush.msra.mxu0 %v1989
          %2028 = vmatpush.msra.mxu0 %v1987
          %2029 = vmatpush.msra.mxu0 %v1985
          %2030 = vmatpush.msra.mxu0 %v1983
          %2031 = vmatmul.f32.gmra.mxu0 %v1949
          %v2032 = vpop.f32.mrf.mxu0
          %v2033 = vadd.f32 0.0, %v2032
          %2034 = vdwg.mxu0
          %2035 = vmatpush.msra.mxu0 %v2014
          %2036 = vmatpush.msra.mxu0 %v2012
          %2037 = vmatpush.msra.mxu0 %v2010
          %2038 = vmatpush.msra.mxu0 %v2008
          %2039 = vmatpush.msra.mxu0 %v2006
          %2040 = vmatpush.msra.mxu0 %v2004
          %2041 = vmatpush.msra.mxu0 %v2002
          %2042 = vmatpush.msra.mxu0 %v2000
          %2043 = vmatpush.msra.mxu0 %v1998
          %2044 = vmatpush.msra.mxu0 %v1996
          %2045 = vmatpush.msra.mxu0 %v1994
          %2046 = vmatpush.msra.mxu0 %v1992
          %2047 = vmatpush.msra.mxu0 %v1990
          %2048 = vmatpush.msra.mxu0 %v1988
          %2049 = vmatpush.msra.mxu0 %v1986
          %2050 = vmatpush.msra.mxu0 %v1984
          %2051 = vmatmul.f32.gmra.mxu0 %v1949
          %v2052 = vpop.f32.mrf.mxu0
          %v2053 = vadd.f32 0.0, %v2052
          %2054 = vdwg.mxu0
          %2055 = vmatpush.msra.mxu0 %v1981
          %2056 = vmatpush.msra.mxu0 %v1979
          %2057 = vmatpush.msra.mxu0 %v1977
          %2058 = vmatpush.msra.mxu0 %v1975
          %2059 = vmatpush.msra.mxu0 %v1973
          %2060 = vmatpush.msra.mxu0 %v1971
          %2061 = vmatpush.msra.mxu0 %v1969
          %2062 = vmatpush.msra.mxu0 %v1967
          %2063 = vmatpush.msra.mxu0 %v1965
          %2064 = vmatpush.msra.mxu0 %v1963
          %2065 = vmatpush.msra.mxu0 %v1961
          %2066 = vmatpush.msra.mxu0 %v1959
          %2067 = vmatpush.msra.mxu0 %v1957
          %2068 = vmatpush.msra.mxu0 %v1955
          %2069 = vmatpush.msra.mxu0 %v1953
          %2070 = vmatpush.msra.mxu0 %v1951
          %2071 = vmatmul.f32.gmra.mxu0 %v1881
          %v2072 = vpop.f32.mrf.mxu0
          %v2073 = vadd.f32 %v2033, %v2072
          %2074 = vdwg.mxu0
          %2075 = vmatpush.msra.mxu0 %v1982
          %2076 = vmatpush.msra.mxu0 %v1980
          %2077 = vmatpush.msra.mxu0 %v1978
          %2078 = vmatpush.msra.mxu0 %v1976
          %2079 = vmatpush.msra.mxu0 %v1974
          %2080 = vmatpush.msra.mxu0 %v1972
          %2081 = vmatpush.msra.mxu0 %v1970
          %2082 = vmatpush.msra.mxu0 %v1968
          %2083 = vmatpush.msra.mxu0 %v1966
          %2084 = vmatpush.msra.mxu0 %v1964
          %2085 = vmatpush.msra.mxu0 %v1962
          %2086 = vmatpush.msra.mxu0 %v1960
          %2087 = vmatpush.msra.mxu0 %v1958
          %2088 = vmatpush.msra.mxu0 %v1956
          %2089 = vmatpush.msra.mxu0 %v1954
          %2090 = vmatpush.msra.mxu0 %v1952
          %2091 = vmatmul.f32.gmra.mxu0 %v1881
          %v2092 = vpop.f32.mrf.mxu0
          %v2093 = vadd.f32 %v2053, %v2092
          %2094 = vdwg.mxu0
          %v2095 = vld [vmem:[%s7] sm:$0x3]
          %v2097 = vperm.slane %v2095, 0
          %v2098 = vperm.slane %v2095, 1
          %v2101 = vadd.f32 %v2073, %v2097
          %v2102 = vadd.f32 %v2093, %v2098
          %v2103 = vmin.f32 %v2101, 20.0
          %v2104 = vmin.f32 %v2102, 20.0
          %v2105 = vmul.f32 %v2103, 1.442695
          %v2106 = vpow.pop %v2105
          %v2107 = vmul.f32 %v2104, 1.442695
          %v2108 = vpow.pop %v2107
          %v2109 = vadd.f32 %v2106, 1.0
          %v2110 = vadd.f32 %v2108, 1.0
          %v2111 = vmul.f32 %v2109, %v2109
          %v2112 = vmul.f32 %v2110, %v2110
          %v2113 = vsub.f32 %v2111, 1.0
          %v2114 = vsub.f32 %v2112, 1.0
          %v2115 = vadd.f32 %v2111, 1.0
          %v2116 = vadd.f32 %v2112, 1.0
          %v2117 = vrcp.pop %v2115
          %v2118 = vmul.f32 %v2115, %v2117
          %v2119 = vsub.f32 1.0, %v2118
          %v2120 = vmul.f32 %v2117, %v2119
          %v2121 = vadd.f32 %v2117, %v2120
          %vm2122 = vweird.f32 %v2115
          %vm2123 = vweird.f32 %v2117
          %vm2124 = vmor %vm2122, %vm2123
          %v2125 = vsel %vm2124, %v2117, %v2121
          %v2126 = vand.u32 2147483647, %v2115
          %vm2127 = vcmp.eq.f32.partialorder %v2126, 8.507059e+37
          %v2128 = vand.u32 %v2115, 2147483648
          %v2129 = vor.u32 1.1754944e-38, %v2128
          %v2130 = vsel %vm2127, %v2129, %v2125
          %v2131 = vmul.f32 %v2113, %v2130
          %v2132 = vrcp.pop %v2116
          %v2133 = vmul.f32 %v2116, %v2132
          %v2134 = vsub.f32 1.0, %v2133
          %v2135 = vmul.f32 %v2132, %v2134
          %v2136 = vadd.f32 %v2132, %v2135
          %vm2137 = vweird.f32 %v2116
          %vm2138 = vweird.f32 %v2132
          %vm2139 = vmor %vm2137, %vm2138
          %v2140 = vsel %vm2139, %v2132, %v2136
          %v2141 = vand.u32 2147483647, %v2116
          %vm2142 = vcmp.eq.f32.partialorder %v2141, 8.507059e+37
          %v2143 = vand.u32 %v2116, 2147483648
          %v2144 = vor.u32 1.1754944e-38, %v2143
          %v2145 = vsel %vm2142, %v2144, %v2140
          %v2146 = vmul.f32 %v2114, %v2145
          %vm2147 = vcmp.gt.f32.partialorder %v2101, 20.0
          %vm2148 = vcmp.gt.f32.partialorder %v2102, 20.0
          %v2149 = vmul.f32 %v2101, %v2131
          %v2150 = vmul.f32 %v2102, %v2146
          %v2151 = vsel %vm2147, %v2101, %v2149
          %v2152 = vsel %vm2148, %v2102, %v2150
          %v2153 = vld [vmem:[#allocation10] sm:$0xff]
          %v2154 = vld [vmem:[#allocation10 + $0x8] sm:$0xff]
          %v2155 = vld [vmem:[#allocation10 + $0x10] sm:$0xff]
          %v2156 = vld [vmem:[#allocation10 + $0x18] sm:$0xff]
          %v2157 = vld [vmem:[#allocation10 + $0x20] sm:$0xff]
          %v2158 = vld [vmem:[#allocation10 + $0x28] sm:$0xff]
          %v2159 = vld [vmem:[#allocation10 + $0x30] sm:$0xff]
          %v2160 = vld [vmem:[#allocation10 + $0x38] sm:$0xff]
          %v2161 = vld [vmem:[#allocation10 + $0x40] sm:$0xff]
          %v2162 = vld [vmem:[#allocation10 + $0x48] sm:$0xff]
          %v2163 = vld [vmem:[#allocation10 + $0x50] sm:$0xff]
          %v2164 = vld [vmem:[#allocation10 + $0x58] sm:$0xff]
          %v2165 = vld [vmem:[#allocation10 + $0x60] sm:$0xff]
          %v2166 = vld [vmem:[#allocation10 + $0x68] sm:$0xff]
          %v2167 = vld [vmem:[#allocation10 + $0x70] sm:$0xff]
          %v2168 = vld [vmem:[#allocation10 + $0x78] sm:$0xff]
          %v2169 = vld [vmem:[#allocation10 + $0x80] sm:$0xff]
          %v2170 = vld [vmem:[#allocation10 + $0x88] sm:$0xff]
          %v2171 = vld [vmem:[#allocation10 + $0x90] sm:$0xff]
          %v2172 = vld [vmem:[#allocation10 + $0x98] sm:$0xff]
          %v2173 = vld [vmem:[#allocation10 + $0xa0] sm:$0xff]
          %v2174 = vld [vmem:[#allocation10 + $0xa8] sm:$0xff]
          %v2175 = vld [vmem:[#allocation10 + $0xb0] sm:$0xff]
          %v2176 = vld [vmem:[#allocation10 + $0xb8] sm:$0xff]
          %v2177 = vld [vmem:[#allocation10 + $0xc0] sm:$0xff]
          %v2178 = vld [vmem:[#allocation10 + $0xc8] sm:$0xff]
          %v2179 = vld [vmem:[#allocation10 + $0xd0] sm:$0xff]
          %v2180 = vld [vmem:[#allocation10 + $0xd8] sm:$0xff]
          %v2181 = vld [vmem:[#allocation10 + $0xe0] sm:$0xff]
          %v2182 = vld [vmem:[#allocation10 + $0xe8] sm:$0xff]
          %v2183 = vld [vmem:[#allocation10 + $0xf0] sm:$0xff]
          %v2184 = vld [vmem:[#allocation10 + $0xf8] sm:$0xff]
          %v2185 = vld [vmem:[#allocation10 + $0x100] sm:$0xff]
          %v2186 = vld [vmem:[#allocation10 + $0x108] sm:$0xff]
          %v2187 = vld [vmem:[#allocation10 + $0x110] sm:$0xff]
          %v2188 = vld [vmem:[#allocation10 + $0x118] sm:$0xff]
          %v2189 = vld [vmem:[#allocation10 + $0x120] sm:$0xff]
          %v2190 = vld [vmem:[#allocation10 + $0x128] sm:$0xff]
          %v2191 = vld [vmem:[#allocation10 + $0x130] sm:$0xff]
          %v2192 = vld [vmem:[#allocation10 + $0x138] sm:$0xff]
          %v2193 = vld [vmem:[#allocation10 + $0x140] sm:$0xff]
          %v2194 = vld [vmem:[#allocation10 + $0x148] sm:$0xff]
          %v2195 = vld [vmem:[#allocation10 + $0x150] sm:$0xff]
          %v2196 = vld [vmem:[#allocation10 + $0x158] sm:$0xff]
          %v2197 = vld [vmem:[#allocation10 + $0x160] sm:$0xff]
          %v2198 = vld [vmem:[#allocation10 + $0x168] sm:$0xff]
          %v2199 = vld [vmem:[#allocation10 + $0x170] sm:$0xff]
          %v2200 = vld [vmem:[#allocation10 + $0x178] sm:$0xff]
          %v2201 = vld [vmem:[#allocation10 + $0x180] sm:$0xff]
          %v2202 = vld [vmem:[#allocation10 + $0x188] sm:$0xff]
          %v2203 = vld [vmem:[#allocation10 + $0x190] sm:$0xff]
          %v2204 = vld [vmem:[#allocation10 + $0x198] sm:$0xff]
          %v2205 = vld [vmem:[#allocation10 + $0x1a0] sm:$0xff]
          %v2206 = vld [vmem:[#allocation10 + $0x1a8] sm:$0xff]
          %v2207 = vld [vmem:[#allocation10 + $0x1b0] sm:$0xff]
          %v2208 = vld [vmem:[#allocation10 + $0x1b8] sm:$0xff]
          %v2209 = vld [vmem:[#allocation10 + $0x1c0] sm:$0xff]
          %v2210 = vld [vmem:[#allocation10 + $0x1c8] sm:$0xff]
          %v2211 = vld [vmem:[#allocation10 + $0x1d0] sm:$0xff]
          %v2212 = vld [vmem:[#allocation10 + $0x1d8] sm:$0xff]
          %v2213 = vld [vmem:[#allocation10 + $0x1e0] sm:$0xff]
          %v2214 = vld [vmem:[#allocation10 + $0x1e8] sm:$0xff]
          %v2215 = vld [vmem:[#allocation10 + $0x1f0] sm:$0xff]
          %v2216 = vld [vmem:[#allocation10 + $0x1f8] sm:$0xff]
          %v2217 = vld [vmem:[%s9] sm:$0x3]
          %v2219 = vperm.slane %v2217, 0
          %v2220 = vperm.slane %v2217, 1
          %2223 = vmatpush.msra.mxu0 %v2183
          %2224 = vmatpush.msra.mxu0 %v2181
          %2225 = vmatpush.msra.mxu0 %v2179
          %2226 = vmatpush.msra.mxu0 %v2177
          %2227 = vmatpush.msra.mxu0 %v2175
          %2228 = vmatpush.msra.mxu0 %v2173
          %2229 = vmatpush.msra.mxu0 %v2171
          %2230 = vmatpush.msra.mxu0 %v2169
          %2231 = vmatpush.msra.mxu0 %v2167
          %2232 = vmatpush.msra.mxu0 %v2165
          %2233 = vmatpush.msra.mxu0 %v2163
          %2234 = vmatpush.msra.mxu0 %v2161
          %2235 = vmatpush.msra.mxu0 %v2159
          %2236 = vmatpush.msra.mxu0 %v2157
          %2237 = vmatpush.msra.mxu0 %v2155
          %2238 = vmatpush.msra.mxu0 %v2153
          %2239 = vmatmul.f32.gmra.mxu0 %v2151
          %v2240 = vpop.f32.mrf.mxu0
          %v2241 = vadd.f32 %v2219, %v2240
          %2242 = vdwg.mxu0
          %2243 = vmatpush.msra.mxu0 %v2215
          %2244 = vmatpush.msra.mxu0 %v2213
          %2245 = vmatpush.msra.mxu0 %v2211
          %2246 = vmatpush.msra.mxu0 %v2209
          %2247 = vmatpush.msra.mxu0 %v2207
          %2248 = vmatpush.msra.mxu0 %v2205
          %2249 = vmatpush.msra.mxu0 %v2203
          %2250 = vmatpush.msra.mxu0 %v2201
          %2251 = vmatpush.msra.mxu0 %v2199
          %2252 = vmatpush.msra.mxu0 %v2197
          %2253 = vmatpush.msra.mxu0 %v2195
          %2254 = vmatpush.msra.mxu0 %v2193
          %2255 = vmatpush.msra.mxu0 %v2191
          %2256 = vmatpush.msra.mxu0 %v2189
          %2257 = vmatpush.msra.mxu0 %v2187
          %2258 = vmatpush.msra.mxu0 %v2185
          %2259 = vmatmul.f32.gmra.mxu0 %v2152
          %v2260 = vpop.f32.mrf.mxu0
          %v2261 = vadd.f32 %v2241, %v2260
          %2262 = vdwg.mxu0
          %2263 = vmatpush.msra.mxu0 %v2184
          %2264 = vmatpush.msra.mxu0 %v2182
          %2265 = vmatpush.msra.mxu0 %v2180
          %2266 = vmatpush.msra.mxu0 %v2178
          %2267 = vmatpush.msra.mxu0 %v2176
          %2268 = vmatpush.msra.mxu0 %v2174
          %2269 = vmatpush.msra.mxu0 %v2172
          %2270 = vmatpush.msra.mxu0 %v2170
          %2271 = vmatpush.msra.mxu0 %v2168
          %2272 = vmatpush.msra.mxu0 %v2166
          %2273 = vmatpush.msra.mxu0 %v2164
          %2274 = vmatpush.msra.mxu0 %v2162
          %2275 = vmatpush.msra.mxu0 %v2160
          %2276 = vmatpush.msra.mxu0 %v2158
          %2277 = vmatpush.msra.mxu0 %v2156
          %2278 = vmatpush.msra.mxu0 %v2154
          %2279 = vmatmul.f32.gmra.mxu0 %v2151
          %v2280 = vpop.f32.mrf.mxu0
          %v2281 = vadd.f32 %v2220, %v2280
          %2282 = vdwg.mxu0
          %2283 = vmatpush.msra.mxu0 %v2216
          %2284 = vmatpush.msra.mxu0 %v2214
          %2285 = vmatpush.msra.mxu0 %v2212
          %2286 = vmatpush.msra.mxu0 %v2210
          %2287 = vmatpush.msra.mxu0 %v2208
          %2288 = vmatpush.msra.mxu0 %v2206
          %2289 = vmatpush.msra.mxu0 %v2204
          %2290 = vmatpush.msra.mxu0 %v2202
          %2291 = vmatpush.msra.mxu0 %v2200
          %2292 = vmatpush.msra.mxu0 %v2198
          %2293 = vmatpush.msra.mxu0 %v2196
          %2294 = vmatpush.msra.mxu0 %v2194
          %2295 = vmatpush.msra.mxu0 %v2192
          %2296 = vmatpush.msra.mxu0 %v2190
          %2297 = vmatpush.msra.mxu0 %v2188
          %2298 = vmatpush.msra.mxu0 %v2186
          %2299 = vmatmul.f32.gmra.mxu0 %v2152
          %v2300 = vpop.f32.mrf.mxu0
          %v2301 = vadd.f32 %v2281, %v2300
          %2302 = vdwg.mxu0
          %v2303 = vmin.f32 %v2261, 20.0
          %v2304 = vmin.f32 %v2301, 20.0
          %v2305 = vmul.f32 %v2303, 1.442695
          %v2306 = vpow.pop %v2305
          %v2307 = vmul.f32 %v2304, 1.442695
          %v2308 = vpow.pop %v2307
          %v2309 = vadd.f32 %v2306, 1.0
          %v2310 = vadd.f32 %v2308, 1.0
          %v2311 = vmul.f32 %v2309, %v2309
          %v2312 = vmul.f32 %v2310, %v2310
          %v2313 = vsub.f32 %v2311, 1.0
          %v2314 = vsub.f32 %v2312, 1.0
          %v2315 = vadd.f32 %v2311, 1.0
          %v2316 = vadd.f32 %v2312, 1.0
          %v2317 = vrcp.pop %v2315
          %v2318 = vmul.f32 %v2315, %v2317
          %v2319 = vsub.f32 1.0, %v2318
          %v2320 = vmul.f32 %v2317, %v2319
          %v2321 = vadd.f32 %v2317, %v2320
          %vm2322 = vweird.f32 %v2315
          %vm2323 = vweird.f32 %v2317
          %vm2324 = vmor %vm2322, %vm2323
          %v2325 = vsel %vm2324, %v2317, %v2321
          %v2326 = vand.u32 2147483647, %v2315
          %vm2327 = vcmp.eq.f32.partialorder %v2326, 8.507059e+37
          %v2328 = vand.u32 %v2315, 2147483648
          %v2329 = vor.u32 1.1754944e-38, %v2328
          %v2330 = vsel %vm2327, %v2329, %v2325
          %v2331 = vmul.f32 %v2313, %v2330
          %v2332 = vrcp.pop %v2316
          %v2333 = vmul.f32 %v2316, %v2332
          %v2334 = vsub.f32 1.0, %v2333
          %v2335 = vmul.f32 %v2332, %v2334
          %v2336 = vadd.f32 %v2332, %v2335
          %vm2337 = vweird.f32 %v2316
          %vm2338 = vweird.f32 %v2332
          %vm2339 = vmor %vm2337, %vm2338
          %v2340 = vsel %vm2339, %v2332, %v2336
          %v2341 = vand.u32 2147483647, %v2316
          %vm2342 = vcmp.eq.f32.partialorder %v2341, 8.507059e+37
          %v2343 = vand.u32 %v2316, 2147483648
          %v2344 = vor.u32 1.1754944e-38, %v2343
          %v2345 = vsel %vm2342, %v2344, %v2340
          %v2346 = vmul.f32 %v2314, %v2345
          %vm2347 = vcmp.gt.f32.partialorder %v2261, 20.0
          %vm2348 = vcmp.gt.f32.partialorder %v2301, 20.0
          %v2349 = vmul.f32 %v2261, %v2331
          %v2350 = vmul.f32 %v2301, %v2346
          %v2351 = vsel %vm2347, %v2261, %v2349
          %v2352 = vsel %vm2348, %v2301, %v2350
          %v2353 = vld [vmem:[%s10] sm:$0xff]
          %v2354 = vld [vmem:[%s10 + $0x8] sm:$0xff]
          %v2355 = vld [vmem:[%s10 + $0x10] sm:$0xff]
          %v2356 = vld [vmem:[%s10 + $0x18] sm:$0xff]
          %v2357 = vld [vmem:[%s10 + $0x20] sm:$0xff]
          %v2358 = vld [vmem:[%s10 + $0x28] sm:$0xff]
          %v2359 = vld [vmem:[%s10 + $0x30] sm:$0xff]
          %v2360 = vld [vmem:[%s10 + $0x38] sm:$0xff]
          %v2361 = vld [vmem:[%s10 + $0x40] sm:$0xff]
          %v2362 = vld [vmem:[%s10 + $0x48] sm:$0xff]
          %v2363 = vld [vmem:[%s10 + $0x50] sm:$0xff]
          %v2364 = vld [vmem:[%s10 + $0x58] sm:$0xff]
          %v2365 = vld [vmem:[%s10 + $0x60] sm:$0xff]
          %v2366 = vld [vmem:[%s10 + $0x68] sm:$0xff]
          %v2367 = vld [vmem:[%s10 + $0x70] sm:$0xff]
          %v2368 = vld [vmem:[%s10 + $0x78] sm:$0xff]
          %v2369 = vld [vmem:[%s10 + $0x80] sm:$0xff]
          %v2370 = vld [vmem:[%s10 + $0x88] sm:$0xff]
          %v2371 = vld [vmem:[%s10 + $0x90] sm:$0xff]
          %v2372 = vld [vmem:[%s10 + $0x98] sm:$0xff]
          %v2373 = vld [vmem:[%s10 + $0xa0] sm:$0xff]
          %v2374 = vld [vmem:[%s10 + $0xa8] sm:$0xff]
          %v2375 = vld [vmem:[%s10 + $0xb0] sm:$0xff]
          %v2376 = vld [vmem:[%s10 + $0xb8] sm:$0xff]
          %v2377 = vld [vmem:[%s10 + $0xc0] sm:$0xff]
          %v2378 = vld [vmem:[%s10 + $0xc8] sm:$0xff]
          %v2379 = vld [vmem:[%s10 + $0xd0] sm:$0xff]
          %v2380 = vld [vmem:[%s10 + $0xd8] sm:$0xff]
          %v2381 = vld [vmem:[%s10 + $0xe0] sm:$0xff]
          %v2382 = vld [vmem:[%s10 + $0xe8] sm:$0xff]
          %v2383 = vld [vmem:[%s10 + $0xf0] sm:$0xff]
          %v2384 = vld [vmem:[%s10 + $0xf8] sm:$0xff]
          %v2385 = vld [vmem:[%s11] sm:$0x1]
          %v2387 = vperm.slane %v2385, 0
          %2389 = vmatpush.msra.mxu0 %v2368
          %2390 = vmatpush.msra.mxu0 %v2367
          %2391 = vmatpush.msra.mxu0 %v2366
          %2392 = vmatpush.msra.mxu0 %v2365
          %2393 = vmatpush.msra.mxu0 %v2364
          %2394 = vmatpush.msra.mxu0 %v2363
          %2395 = vmatpush.msra.mxu0 %v2362
          %2396 = vmatpush.msra.mxu0 %v2361
          %2397 = vmatpush.msra.mxu0 %v2360
          %2398 = vmatpush.msra.mxu0 %v2359
          %2399 = vmatpush.msra.mxu0 %v2358
          %2400 = vmatpush.msra.mxu0 %v2357
          %2401 = vmatpush.msra.mxu0 %v2356
          %2402 = vmatpush.msra.mxu0 %v2355
          %2403 = vmatpush.msra.mxu0 %v2354
          %2404 = vmatpush.msra.mxu0 %v2353
          %2405 = vmatmul.f32.gmra.mxu0 %v2351
          %v2406 = vpop.f32.mrf.mxu0
          %v2407 = vadd.f32 %v2387, %v2406
          %2408 = vdwg.mxu0
          %2409 = vmatpush.msra.mxu0 %v2384
          %2410 = vmatpush.msra.mxu0 %v2383
          %2411 = vmatpush.msra.mxu0 %v2382
          %2412 = vmatpush.msra.mxu0 %v2381
          %2413 = vmatpush.msra.mxu0 %v2380
          %2414 = vmatpush.msra.mxu0 %v2379
          %2415 = vmatpush.msra.mxu0 %v2378
          %2416 = vmatpush.msra.mxu0 %v2377
          %2417 = vmatpush.msra.mxu0 %v2376
          %2418 = vmatpush.msra.mxu0 %v2375
          %2419 = vmatpush.msra.mxu0 %v2374
          %2420 = vmatpush.msra.mxu0 %v2373
          %2421 = vmatpush.msra.mxu0 %v2372
          %2422 = vmatpush.msra.mxu0 %v2371
          %2423 = vmatpush.msra.mxu0 %v2370
          %2424 = vmatpush.msra.mxu0 %v2369
          %2425 = vmatmul.f32.gmra.mxu0 %v2352
          %v2426 = vpop.f32.mrf.mxu0
          %v2427 = vadd.f32 %v2407, %v2426
          %2428 = vdwg.mxu0
          %vm2429 = vcmask 80896
          %2430 = vst.msk [vmem:[#allocation12] sm:$0xff] %vm2429, %v2427
        $region88: #{tpu_custom_call.1} parent=67 // pred_fallthru
          _
        // Predicated region
        $region89: #{tpu_custom_call.1} parent=67 // pred_check
          %p2431 = pneg %p316
        $region90: #{tpu_custom_call.1} parent=67 // pred_check_branch
          %2433 = sbr.rel (%p2431) target = $region92
        $region91: #{tpu_custom_call.1} parent=67 // pred_region
          %2435 = vsyncadd [#allocation6], 0
          %s2437 = sshll.u32 [#allocation12], 4
          %s2438 = int_to_ptr.vmem [resolvable:$true] %s2437
          %s2439 = sshll.u32 %s12, 4
          %s2440 = int_to_ptr.hbm [resolvable:$true] %s2439
          %2442 = dma.vmem_to_hbm [thread:$0]  %s2438, 128, %s2440, [#allocation6]
        $region92: #{tpu_custom_call.1} parent=67 // pred_fallthru
          _
        // Predicated region
        $region93: #{tpu_custom_call.1} parent=67 // pred_check
          %p2443 = pneg %p316
        $region94: #{tpu_custom_call.1} parent=67 // pred_check_branch
          %2445 = sbr.rel (%p2443) target = $region96
        $region95: #{tpu_custom_call.1} parent=67 // pred_region
          %2447 = dma.done [#allocation6], 128
        $region96: #{tpu_custom_call.1} parent=67 // pred_fallthru
          _
      $region68: #{tpu_custom_call.1} parent=5 // pred_fallthru
        _
      %p2448 = scmp.le.s32.totalorder 2, %s26
      // Predicated region
      $region97: #{tpu_custom_call.1} parent=5 // pred_check
        %p2449 = pneg %p2448
      $region98: #{tpu_custom_call.1} parent=5 // pred_check_branch
        %2451 = sbr.rel (%p2449) target = $region100
      $region99: #{tpu_custom_call.1} parent=5 // pred_region
        %s2452 = ssub.s32 %s26, 2
      $region100: #{tpu_custom_call.1} parent=5 // pred_fallthru
        _
    $region6: #{tpu_custom_call.1} parent=1 // loop_footer
      %s30 = sadd.s32 1, %s26
    $region7: #{tpu_custom_call.1} parent=1 // loop_footer_branch
      %25 = sbr.rel target = $region3
    $region8: #{tpu_custom_call.1} parent=1 // loop_exit
      _
    %2453 = vsyncpa [#allocation5], 1
    %s2454 = scalar_lea.sflag [#allocation5], 1
    %2455 = vsyncpa %s2454, 1
    %2456 = vsyncpa [#allocation8], 1
    %s2457 = scalar_lea.sflag [#allocation8], 1
    %2458 = vsyncpa %s2457, 1
    %2459 = vsyncpa [#allocation11], 1
    %2460 = vsyncpa [#allocation6], 1
    %s2461 = scalar_lea.sflag [#allocation6], 1
    %2462 = vsyncpa %s2461, 1

</llo_original>
